<compile_context>
chip_gen: v5e
topology: v5e:2x2
jax: 0.10.0
libtpu: 0.0.40
codegen_flags: <defaults>
</compile_context>

<pallas_src>
import functools

import jax
import jax.numpy as jnp
from jax import lax
from jax.experimental import pallas as pl
from jax.experimental.pallas import tpu as pltpu

EPS = 1e-5


def _residual_block_kernel(
    x_ref,       # (N*H, W*C)   lane-dense NHWC input (VMEM)
    t1_ref,      # (3*W*C, W*C) conv1 block-Toeplitz weights (VMEM)
    g1_ref,      # (1, C)       bn1 gamma
    be1_ref,     # (1, C)       bn1 beta
    t2_hbm_ref,  # (3*W*C, W*C) conv2 weights, left in HBM (pl.ANY)
    g2_ref,      # (1, C)       bn2 gamma
    be2_ref,     # (1, C)       bn2 beta
    alpha_ref,   # (1, 1)       PReLU alpha, in SMEM
    out_ref,     # (N*H, W*C)
    t2_vmem,     # (3*W*C, W*C) VMEM scratch for conv2 weights
    t2_sem,      # DMA semaphore for the t2 copy
    *, H, split_k,
):
    NH, WC = x_ref.shape
    C = g1_ref.shape[1]
    W = WC // C
    inv_m = 1.0 / float(NH * W)            # 1 / (N*H*W) samples per channel

    # Read the SMEM scalar early (before any DMA wait breaks sst->sld fwd).
    alpha = alpha_ref[0, 0]

    # Overlap conv2's 192 KiB weight DMA with conv1 + bn1 + PReLU.
    t2_copy = pltpu.make_async_copy(t2_hbm_ref, t2_vmem, t2_sem)
    t2_copy.start()

    x2d = x_ref[...]

    # h index of each row (rows are (n, h) pairs, h fastest).
    row_h = lax.broadcasted_iota(jnp.int32, (NH, 1), 0) % H

    def shift_h(v, dh):
        """Row r of the result holds the same image's row at h + dh
        (zero where h + dh falls outside [0, H)).  XLU sublane rotate; the
        mask zeroes both image-boundary rows and the rotation wrap-around."""
        rolled = pltpu.roll(v, shift=(-dh) % NH, axis=0)
        valid = (row_h + dh >= 0) & (row_h + dh < H)
        return jnp.where(valid, rolled, 0.0)

    def conv3x3(v, t_ref):
        # No bias: BN's mean-subtraction cancels it exactly.
        vm1 = shift_h(v, -1)
        vp1 = shift_h(v, 1)
        if split_k:
            # v5e (128-deep MXU): 3 accumulated K=WC matmuls, no patches buf.
            acc = jnp.dot(vm1, t_ref[0:WC, :],
                          preferred_element_type=jnp.float32)
            acc = acc + jnp.dot(v, t_ref[WC:2 * WC, :],
                                preferred_element_type=jnp.float32)
            return acc + jnp.dot(vp1, t_ref[2 * WC:3 * WC, :],
                                 preferred_element_type=jnp.float32)
        # v6e/v7x (256-deep MXU): single K = 3*WC matmul.
        patches = jnp.concatenate([vm1, v, vp1], axis=1)        # (NH, 3*WC)
        return jnp.dot(patches, t_ref[...],
                       preferred_element_type=jnp.float32)

    # Channel-pooling constants: pool[w*C + c, c'] = (c == c').
    lane = lax.broadcasted_iota(jnp.int32, (WC, C), 0)
    chan = lax.broadcasted_iota(jnp.int32, (WC, C), 1)
    pool = (lane % C == chan).astype(jnp.float32)               # (WC, C)
    lane_t = lax.broadcasted_iota(jnp.int32, (C, WC), 1)
    chan_t = lax.broadcasted_iota(jnp.int32, (C, WC), 0)
    pool_t = (lane_t % C == chan_t).astype(jnp.float32)         # (C, WC)

    def batchnorm(y, g_ref, be_ref):
        # Training-mode BN (per-batch stats, biased var), two fused matmuls:
        #   [sum; sum_sq] (2,WC) @ pool (WC,C)   -> per-channel s1, s2
        #   [scale; shift] (2,C) @ pool_t (C,WC) -> lane-dense scale, shift
        # Single-pass var = E[x^2] - mean^2; fine at unit-scale activations
        # (use the shifted/two-pass form if production ranges grow).
        stacked = jnp.concatenate(
            [jnp.sum(y, axis=0, keepdims=True),
             jnp.sum(y * y, axis=0, keepdims=True)], axis=0)    # (2, WC)
        s = jnp.dot(stacked, pool, preferred_element_type=jnp.float32)  # (2,C)
        mean = s[0:1, :] * inv_m
        var = s[1:2, :] * inv_m - mean * mean
        scale_c = g_ref[...] * lax.rsqrt(var + EPS)             # (1, C)
        shift_c = be_ref[...] - mean * scale_c                  # (1, C)
        ss = jnp.dot(jnp.concatenate([scale_c, shift_c], axis=0), pool_t,
                     preferred_element_type=jnp.float32)        # (2, WC)
        return y * ss[0:1, :] + ss[1:2, :]

    # conv1 -> bn1 -> prelu
    y = conv3x3(x2d, t1_ref)
    y = batchnorm(y, g1_ref, be1_ref)
    y = jnp.where(y > 0, y, alpha * y)

    # conv2 -> bn2 (conv1 activation stays in registers; weights just landed)
    t2_copy.wait()
    r = conv3x3(y, t2_vmem)
    r = batchnorm(r, g2_ref, be2_ref)

    # residual add with the (unpadded) input
    out_ref[...] = x2d + r


def _block_toeplitz(w_oihw, W):
    """OIHW 3x3 conv weights -> (3*W*Cin, W*Cout) block-Toeplitz matrix.

    Rows are kh-major, then (w_in, ci); columns are (w_out, co).  The 'same'
    zero padding along W is encoded by the missing off-band blocks.  Built
    ONCE, eagerly, outside the jitted per-call path.
    """
    _, _, KH, KW = w_oihw.shape
    wt = jnp.transpose(w_oihw, (2, 3, 1, 0)).astype(jnp.float32)  # (3,3,Ci,Co)
    c_in, c_out = wt.shape[2], wt.shape[3]
    blocks = []
    for kh in range(KH):
        t = jnp.zeros((W * c_in, W * c_out), jnp.float32)
        for kw in range(KW):
            # w_in = w_out + (kw - 1)
            shift = jnp.eye(W, k=-(kw - 1), dtype=jnp.float32)
            t = t + jnp.kron(shift, wt[kh, kw])
        blocks.append(t)
    return jnp.concatenate(blocks, axis=0)                       # (3*W*Ci, W*Co)


def _use_split_k_conv():
    """True on 128-deep-MXU chips (<= v5): split K=3*WC into three K=WC."""
    try:
        kind = jax.devices()[0].device_kind.lower()
    except Exception:
        return False
    return any(v in kind for v in ("v2", "v3", "v4", "v5"))


def make_residual_block_params(w1_oihw, b1, g1, be1, alpha,
                               w2_oihw, b2, g2, be2, W):
    """One-time (outside jit) parameter prep: Toeplitz expansion + reshapes.

    Conv biases b1/b2 are accepted for API parity with the PyTorch module but
    intentionally dropped: training-mode BN subtracts the per-channel mean
    right after each conv, so BN(conv + b) == BN(conv) exactly.
    """
    del b1, b2
    C = w1_oihw.shape[0]
    return dict(
        t1=_block_toeplitz(w1_oihw, W),
        t2=_block_toeplitz(w2_oihw, W),
        g1=g1.reshape(1, C), be1=be1.reshape(1, C),
        g2=g2.reshape(1, C), be2=be2.reshape(1, C),
        alpha=jnp.asarray(alpha, jnp.float32).reshape(1, 1),
    )


@jax.jit
def residual_block_pallas_nhwc(x_nhwc, params):
    """Forward pass of the PyTorch ResidualBlock, NHWC end-to-end.

    x_nhwc: (N, H, W, C) float32 with W*C a multiple of 128 (lane-dense).
    """
    N, H, W, C = x_nhwc.shape
    NH, WC = N * H, W * C

    # NHWC -> lane-dense (N*H, W*C): a layout no-op reshape (no transpose).
    x2d = x_nhwc.reshape(NH, WC)

    kernel = functools.partial(
        _residual_block_kernel, H=H, split_k=_use_split_k_conv())

    full = lambda shape: pl.BlockSpec(shape, lambda i: (0,) * len(shape))
    in_specs = [
        full((NH, WC)),                                   # x
        full((3 * WC, WC)),                               # t1 (auto VMEM)
        full((1, C)), full((1, C)),                       # bn1 gamma/beta
        pl.BlockSpec(memory_space=pl.ANY),                # t2 stays in HBM
        full((1, C)), full((1, C)),                       # bn2 gamma/beta
        pl.BlockSpec(memory_space=pltpu.MemorySpace.SMEM),  # alpha scalar
    ]

    out2d = pl.pallas_call(
        kernel,
        out_shape=jax.ShapeDtypeStruct((NH, WC), jnp.float32),
        grid_spec=pltpu.PrefetchScalarGridSpec(
            num_scalar_prefetch=0,
            grid=(1,),
            in_specs=in_specs,
            out_specs=full((NH, WC)),
            scratch_shapes=[
                pltpu.VMEM((3 * WC, WC), jnp.float32),    # conv2 weight buf
                pltpu.SemaphoreType.DMA(()),              # its DMA semaphore
            ],
        ),
        compiler_params=pltpu.CompilerParams(
            dimension_semantics=("arbitrary",)),
    )(x2d, params["t1"], params["g1"], params["be1"],
      params["t2"], params["g2"], params["be2"], params["alpha"])

    return out2d.reshape(N, H, W, C)


def _reference_nchw(x, w1_oihw, b1, g1, be1, alpha, w2_oihw, b2, g2, be2):
    """Pure-JAX NCHW reference matching the PyTorch module (training-mode BN)."""
    def conv(x, w, b):
        y = lax.conv_general_dilated(
            x, w, window_strides=(1, 1), padding=((1, 1), (1, 1)),
            dimension_numbers=("NCHW", "OIHW", "NCHW"))
        return y + b[None, :, None, None]

    def bn(y, g, be):
        mean = jnp.mean(y, axis=(0, 2, 3), keepdims=True)
        var = jnp.mean((y - mean) ** 2, axis=(0, 2, 3), keepdims=True)
        return (y - mean) * lax.rsqrt(var + EPS) * g[None, :, None, None] \
            + be[None, :, None, None]

    r = conv(x, w1_oihw, b1)
    r = bn(r, g1, be1)
    r = jnp.where(r > 0, r, alpha * r)
    r = conv(r, w2_oihw, b2)
    r = bn(r, g2, be2)
    return x + r


if __name__ == "__main__":
    N, C, H, W = 2, 8, 16, 16  # NCHW like PyTorch; W*C = 128 (lane-dense)

    key = jax.random.PRNGKey(0)
    ks = jax.random.split(key, 9)

    x_nchw = jax.random.normal(ks[0], (N, C, H, W), jnp.float32)

    fan_in = C * 3 * 3
    w1_oihw = jax.random.normal(ks[1], (C, C, 3, 3), jnp.float32) / jnp.sqrt(fan_in)
    b1 = jax.random.normal(ks[2], (C,), jnp.float32) * 0.1
    w2_oihw = jax.random.normal(ks[3], (C, C, 3, 3), jnp.float32) / jnp.sqrt(fan_in)
    b2 = jax.random.normal(ks[4], (C,), jnp.float32) * 0.1

    g1 = 1.0 + 0.1 * jax.random.normal(ks[5], (C,), jnp.float32)
    be1 = 0.1 * jax.random.normal(ks[6], (C,), jnp.float32)
    g2 = 1.0 + 0.1 * jax.random.normal(ks[7], (C,), jnp.float32)
    be2 = 0.1 * jax.random.normal(ks[8], (C,), jnp.float32)

    alpha = jnp.float32(0.25)  # nn.PReLU() default init

    # One-time, eager (outside jit) weight prep: Toeplitz expansion etc.
    params = make_residual_block_params(
        w1_oihw, b1, g1, be1, alpha, w2_oihw, b2, g2, be2, W)
    params = jax.tree_util.tree_map(jax.block_until_ready, params)

    # Model runs NHWC end-to-end; convert the PyTorch-style input once,
    # eagerly, in the test harness (not in the per-call jitted path).
    x_nhwc = jnp.transpose(x_nchw, (0, 2, 3, 1))

    out_nhwc = residual_block_pallas_nhwc(x_nhwc, params)
    jax.block_until_ready(out_nhwc)
    out_nchw = jnp.transpose(out_nhwc, (0, 3, 1, 2))

    ref = _reference_nchw(x_nchw, w1_oihw, b1, g1, be1, alpha,
                          w2_oihw, b2, g2, be2)
    assert out_nchw.shape == (N, C, H, W)
    assert jnp.allclose(out_nchw, ref, atol=1e-4, rtol=1e-4), \
        float(jnp.max(jnp.abs(out_nchw - ref)))

    print("KERNEL_OK")
</pallas_src>

<mosaic_0001>
module attributes {stable_mosaic.version = 11 : i64} {
  func.func @_residual_block_kernel(%arg0: i32, %arg1: memref<32x128xf32, #tpu.memory_space<vmem>>, %arg2: memref<384x128xf32, #tpu.memory_space<vmem>>, %arg3: memref<1x8xf32, #tpu.memory_space<vmem>>, %arg4: memref<1x8xf32, #tpu.memory_space<vmem>>, %arg5: memref<384x128xf32, #tpu.memory_space<any>>, %arg6: memref<1x8xf32, #tpu.memory_space<vmem>>, %arg7: memref<1x8xf32, #tpu.memory_space<vmem>>, %arg8: memref<1x1xf32, #tpu.memory_space<smem>>, %arg9: memref<32x128xf32, #tpu.memory_space<vmem>>, %arg10: memref<384x128xf32, #tpu.memory_space<vmem>>, %arg11: memref<!tpu.dma_semaphore, #tpu.memory_space<semaphore_mem>>) attributes {dimension_semantics = [#tpu.dimension_semantics<arbitrary>], iteration_bounds = array<i64: 1>, scalar_prefetch = 0 : i64, scratch_operands = 2 : i64, tpu.core_type = #tpu.core_type<tc>, window_params = [{pipeline_mode = #tpu.pipeline_mode<synchronous>, transform_indices = @transform_0, window_bounds = array<i64: 32, 128>}, {pipeline_mode = #tpu.pipeline_mode<synchronous>, transform_indices = @transform_1, window_bounds = array<i64: 384, 128>}, {pipeline_mode = #tpu.pipeline_mode<synchronous>, transform_indices = @transform_2, window_bounds = array<i64: 1, 8>}, {pipeline_mode = #tpu.pipeline_mode<synchronous>, transform_indices = @transform_3, window_bounds = array<i64: 1, 8>}, {}, {pipeline_mode = #tpu.pipeline_mode<synchronous>, transform_indices = @transform_5, window_bounds = array<i64: 1, 8>}, {pipeline_mode = #tpu.pipeline_mode<synchronous>, transform_indices = @transform_6, window_bounds = array<i64: 1, 8>}, {transform_indices = @transform_7, window_bounds = array<i64: 1, 1>}, {pipeline_mode = #tpu.pipeline_mode<synchronous>, transform_indices = @transform_8, window_bounds = array<i64: 32, 128>}]} {
    %c0 = arith.constant 0 : index
    %c0_0 = arith.constant 0 : index
    %0 = memref.load %arg8[%c0, %c0_0] : memref<1x1xf32, #tpu.memory_space<smem>>
    tpu.enqueue_dma source(%arg5 : memref<384x128xf32, #tpu.memory_space<any>>) target(%arg10 : memref<384x128xf32, #tpu.memory_space<vmem>>) target_semaphore(%arg11 : memref<!tpu.dma_semaphore, #tpu.memory_space<semaphore_mem>>)
    %c0_1 = arith.constant 0 : index
    %c0_2 = arith.constant 0 : index
    %1 = vector.load %arg1[%c0_1, %c0_2] : memref<32x128xf32, #tpu.memory_space<vmem>>, vector<32x128xf32>
    %2 = tpu.iota {dimensions = array<i32: 0>} : vector<32x1xi32>
    %c16_i32 = arith.constant 16 : i32
    %c0_i32 = arith.constant 0 : i32
    %3 = arith.cmpi eq, %c16_i32, %c0_i32 : i32
    %c1_i32 = arith.constant 1 : i32
    %4 = arith.select %3, %c1_i32, %c16_i32 : i32
    %5 = vector.broadcast %4 : i32 to vector<32x1xi32>
    %6 = arith.remsi %2, %5 : vector<32x1xi32>
    %c0_i32_3 = arith.constant 0 : i32
    %7 = vector.broadcast %c0_i32_3 : i32 to vector<32x1xi32>
    %8 = arith.cmpi ne, %6, %7 : vector<32x1xi32>
    %c0_i32_4 = arith.constant 0 : i32
    %9 = vector.broadcast %c0_i32_4 : i32 to vector<32x1xi32>
    %10 = arith.cmpi slt, %6, %9 : vector<32x1xi32>
    %c0_i32_5 = arith.constant 0 : i32
    %11 = arith.cmpi slt, %4, %c0_i32_5 : i32
    %12 = vector.broadcast %11 : i1 to vector<32x1xi1>
    %13 = vector.broadcast %12 : vector<32x1xi1> to vector<32x1xi1>
    %14 = arith.xori %10, %13 : vector<32x1xi1>
    %15 = arith.andi %14, %8 : vector<32x1xi1>
    %16 = vector.broadcast %4 : i32 to vector<32x1xi32>
    %17 = arith.addi %6, %16 : vector<32x1xi32>
    %18 = arith.select %15, %17, %6 : vector<32x1xi1>, vector<32x1xi32>
    %19 = tpu.iota {dimensions = array<i32: 0>} : vector<128x8xi32>
    %20 = tpu.iota {dimensions = array<i32: 1>} : vector<128x8xi32>
    %c8_i32 = arith.constant 8 : i32
    %c0_i32_6 = arith.constant 0 : i32
    %21 = arith.cmpi eq, %c8_i32, %c0_i32_6 : i32
    %c1_i32_7 = arith.constant 1 : i32
    %22 = arith.select %21, %c1_i32_7, %c8_i32 : i32
    %23 = vector.broadcast %22 : i32 to vector<128x8xi32>
    %24 = arith.remsi %19, %23 : vector<128x8xi32>
    %c0_i32_8 = arith.constant 0 : i32
    %25 = vector.broadcast %c0_i32_8 : i32 to vector<128x8xi32>
    %26 = arith.cmpi ne, %24, %25 : vector<128x8xi32>
    %c0_i32_9 = arith.constant 0 : i32
    %27 = vector.broadcast %c0_i32_9 : i32 to vector<128x8xi32>
    %28 = arith.cmpi slt, %24, %27 : vector<128x8xi32>
    %c0_i32_10 = arith.constant 0 : i32
    %29 = arith.cmpi slt, %22, %c0_i32_10 : i32
    %30 = vector.broadcast %29 : i1 to vector<128x8xi1>
    %31 = vector.broadcast %30 : vector<128x8xi1> to vector<128x8xi1>
    %32 = arith.xori %28, %31 : vector<128x8xi1>
    %33 = arith.andi %32, %26 : vector<128x8xi1>
    %34 = vector.broadcast %22 : i32 to vector<128x8xi32>
    %35 = arith.addi %24, %34 : vector<128x8xi32>
    %36 = arith.select %33, %35, %24 : vector<128x8xi1>, vector<128x8xi32>
    %37 = arith.cmpi eq, %36, %20 : vector<128x8xi32>
    %38 = arith.extui %37 : vector<128x8xi1> to vector<128x8xi32>
    %39 = arith.sitofp %38 : vector<128x8xi32> to vector<128x8xf32>
    %40 = tpu.iota {dimensions = array<i32: 1>} : vector<8x128xi32>
    %41 = tpu.iota {dimensions = array<i32: 0>} : vector<8x128xi32>
    %c8_i32_11 = arith.constant 8 : i32
    %c0_i32_12 = arith.constant 0 : i32
    %42 = arith.cmpi eq, %c8_i32_11, %c0_i32_12 : i32
    %c1_i32_13 = arith.constant 1 : i32
    %43 = arith.select %42, %c1_i32_13, %c8_i32_11 : i32
    %44 = vector.broadcast %43 : i32 to vector<8x128xi32>
    %45 = arith.remsi %40, %44 : vector<8x128xi32>
    %c0_i32_14 = arith.constant 0 : i32
    %46 = vector.broadcast %c0_i32_14 : i32 to vector<8x128xi32>
    %47 = arith.cmpi ne, %45, %46 : vector<8x128xi32>
    %c0_i32_15 = arith.constant 0 : i32
    %48 = vector.broadcast %c0_i32_15 : i32 to vector<8x128xi32>
    %49 = arith.cmpi slt, %45, %48 : vector<8x128xi32>
    %c0_i32_16 = arith.constant 0 : i32
    %50 = arith.cmpi slt, %43, %c0_i32_16 : i32
    %51 = vector.broadcast %50 : i1 to vector<8x128xi1>
    %52 = vector.broadcast %51 : vector<8x128xi1> to vector<8x128xi1>
    %53 = arith.xori %49, %52 : vector<8x128xi1>
    %54 = arith.andi %53, %47 : vector<8x128xi1>
    %55 = vector.broadcast %43 : i32 to vector<8x128xi32>
    %56 = arith.addi %45, %55 : vector<8x128xi32>
    %57 = arith.select %54, %56, %45 : vector<8x128xi1>, vector<8x128xi32>
    %58 = arith.cmpi eq, %57, %41 : vector<8x128xi32>
    %59 = arith.extui %58 : vector<8x128xi1> to vector<8x128xi32>
    %60 = arith.sitofp %59 : vector<8x128xi32> to vector<8x128xf32>
    %c1_i32_17 = arith.constant 1 : i32
    %61 = tpu.dynamic_rotate %1 by %c1_i32_17 dim 0 : vector<32x128xf32>, i32 -> vector<32x128xf32>
    %c-1_i32 = arith.constant -1 : i32
    %62 = vector.broadcast %c-1_i32 : i32 to vector<32x1xi32>
    %63 = arith.addi %18, %62 : vector<32x1xi32>
    %c0_i32_18 = arith.constant 0 : i32
    %64 = vector.broadcast %c0_i32_18 : i32 to vector<32x1xi32>
    %65 = arith.cmpi sge, %63, %64 : vector<32x1xi32>
    %c-1_i32_19 = arith.constant -1 : i32
    %66 = vector.broadcast %c-1_i32_19 : i32 to vector<32x1xi32>
    %67 = arith.addi %18, %66 : vector<32x1xi32>
    %c16_i32_20 = arith.constant 16 : i32
    %68 = vector.broadcast %c16_i32_20 : i32 to vector<32x1xi32>
    %69 = arith.cmpi slt, %67, %68 : vector<32x1xi32>
    %70 = arith.andi %65, %69 : vector<32x1xi1>
    %cst = arith.constant 0.000000e+00 : f32
    %71 = vector.shape_cast %70 : vector<32x1xi1> to vector<32x1xi1>
    %72 = vector.broadcast %71 : vector<32x1xi1> to vector<32x128xi1>
    %73 = vector.broadcast %cst : f32 to vector<32x128xf32>
    %74 = arith.select %72, %61, %73 : vector<32x128xi1>, vector<32x128xf32>
    %c31_i32 = arith.constant 31 : i32
    %75 = tpu.dynamic_rotate %1 by %c31_i32 dim 0 : vector<32x128xf32>, i32 -> vector<32x128xf32>
    %c1_i32_21 = arith.constant 1 : i32
    %76 = vector.broadcast %c1_i32_21 : i32 to vector<32x1xi32>
    %77 = arith.addi %18, %76 : vector<32x1xi32>
    %c0_i32_22 = arith.constant 0 : i32
    %78 = vector.broadcast %c0_i32_22 : i32 to vector<32x1xi32>
    %79 = arith.cmpi sge, %77, %78 : vector<32x1xi32>
    %c1_i32_23 = arith.constant 1 : i32
    %80 = vector.broadcast %c1_i32_23 : i32 to vector<32x1xi32>
    %81 = arith.addi %18, %80 : vector<32x1xi32>
    %c16_i32_24 = arith.constant 16 : i32
    %82 = vector.broadcast %c16_i32_24 : i32 to vector<32x1xi32>
    %83 = arith.cmpi slt, %81, %82 : vector<32x1xi32>
    %84 = arith.andi %79, %83 : vector<32x1xi1>
    %cst_25 = arith.constant 0.000000e+00 : f32
    %85 = vector.shape_cast %84 : vector<32x1xi1> to vector<32x1xi1>
    %86 = vector.broadcast %85 : vector<32x1xi1> to vector<32x128xi1>
    %87 = vector.broadcast %cst_25 : f32 to vector<32x128xf32>
    %88 = arith.select %86, %75, %87 : vector<32x128xi1>, vector<32x128xf32>
    %89 = tpu.concatenate %74, %1, %88 in 1 : vector<32x128xf32>, vector<32x128xf32>, vector<32x128xf32> -> vector<32x384xf32>
    %c0_26 = arith.constant 0 : index
    %c0_27 = arith.constant 0 : index
    %90 = vector.load %arg2[%c0_26, %c0_27] : memref<384x128xf32, #tpu.memory_space<vmem>>, vector<384x128xf32>
    %cst_28 = arith.constant dense<0.000000e+00> : vector<32x128xf32>
    %91 = tpu.matmul %89, %90, %cst_28 {dimension_numbers = #tpu.dot_dimension_numbers<[1], [0], [0], [1], [0, 0, 1, 1], [], []>} : vector<32x384xf32>, vector<384x128xf32>, vector<32x128xf32> -> vector<32x128xf32>
    %cst_29 = arith.constant dense<0.000000e+00> : vector<128xf32>
    %92 = vector.multi_reduction <add>, %91, %cst_29 [0] : vector<32x128xf32> to vector<128xf32>
    %93 = vector.shape_cast %92 : vector<128xf32> to vector<1x128xf32>
    %94 = arith.mulf %91, %91 : vector<32x128xf32>
    %cst_30 = arith.constant dense<0.000000e+00> : vector<128xf32>
    %95 = vector.multi_reduction <add>, %94, %cst_30 [0] : vector<32x128xf32> to vector<128xf32>
    %96 = vector.shape_cast %95 : vector<128xf32> to vector<1x128xf32>
    %97 = tpu.concatenate %93, %96 in 0 : vector<1x128xf32>, vector<1x128xf32> -> vector<2x128xf32>
    %cst_31 = arith.constant dense<0.000000e+00> : vector<2x8xf32>
    %98 = tpu.matmul %97, %39, %cst_31 {dimension_numbers = #tpu.dot_dimension_numbers<[1], [0], [0], [1], [0, 0, 1, 1], [], []>} : vector<2x128xf32>, vector<128x8xf32>, vector<2x8xf32> -> vector<2x8xf32>
    %99 = vector.extract_strided_slice %98 {offsets = [0, 0], sizes = [1, 8], strides = [1, 1]} : vector<2x8xf32> to vector<1x8xf32>
    %cst_32 = arith.constant 0.001953125 : f32
    %100 = vector.broadcast %cst_32 : f32 to vector<1x8xf32>
    %101 = arith.mulf %99, %100 : vector<1x8xf32>
    %102 = vector.extract_strided_slice %98 {offsets = [1, 0], sizes = [1, 8], strides = [1, 1]} : vector<2x8xf32> to vector<1x8xf32>
    %cst_33 = arith.constant 0.001953125 : f32
    %103 = vector.broadcast %cst_33 : f32 to vector<1x8xf32>
    %104 = arith.mulf %102, %103 : vector<1x8xf32>
    %105 = arith.mulf %101, %101 : vector<1x8xf32>
    %106 = arith.subf %104, %105 : vector<1x8xf32>
    %c0_34 = arith.constant 0 : index
    %c0_35 = arith.constant 0 : index
    %107 = vector.load %arg3[%c0_34, %c0_35] : memref<1x8xf32, #tpu.memory_space<vmem>>, vector<1x8xf32>
    %cst_36 = arith.constant 9.99999974E-6 : f32
    %108 = vector.broadcast %cst_36 : f32 to vector<1x8xf32>
    %109 = arith.addf %106, %108 : vector<1x8xf32>
    %110 = math.rsqrt %109 : vector<1x8xf32>
    %111 = arith.mulf %107, %110 : vector<1x8xf32>
    %c0_37 = arith.constant 0 : index
    %c0_38 = arith.constant 0 : index
    %112 = vector.load %arg4[%c0_37, %c0_38] : memref<1x8xf32, #tpu.memory_space<vmem>>, vector<1x8xf32>
    %113 = arith.mulf %101, %111 : vector<1x8xf32>
    %114 = arith.subf %112, %113 : vector<1x8xf32>
    %115 = tpu.concatenate %111, %114 in 0 : vector<1x8xf32>, vector<1x8xf32> -> vector<2x8xf32>
    %cst_39 = arith.constant dense<0.000000e+00> : vector<2x128xf32>
    %116 = tpu.matmul %115, %60, %cst_39 {dimension_numbers = #tpu.dot_dimension_numbers<[1], [0], [0], [1], [0, 0, 1, 1], [], []>} : vector<2x8xf32>, vector<8x128xf32>, vector<2x128xf32> -> vector<2x128xf32>
    %117 = vector.extract_strided_slice %116 {offsets = [0, 0], sizes = [1, 128], strides = [1, 1]} : vector<2x128xf32> to vector<1x128xf32>
    %118 = vector.broadcast %117 : vector<1x128xf32> to vector<32x128xf32>
    %119 = arith.mulf %91, %118 : vector<32x128xf32>
    %120 = vector.extract_strided_slice %116 {offsets = [1, 0], sizes = [1, 128], strides = [1, 1]} : vector<2x128xf32> to vector<1x128xf32>
    %121 = vector.broadcast %120 : vector<1x128xf32> to vector<32x128xf32>
    %122 = arith.addf %119, %121 : vector<32x128xf32>
    %cst_40 = arith.constant 0.000000e+00 : f32
    %123 = vector.broadcast %cst_40 : f32 to vector<32x128xf32>
    %124 = arith.cmpf ogt, %122, %123 : vector<32x128xf32>
    %125 = vector.broadcast %0 : f32 to vector<32x128xf32>
    %126 = arith.mulf %125, %122 : vector<32x128xf32>
    %127 = arith.select %124, %122, %126 : vector<32x128xi1>, vector<32x128xf32>
    tpu.wait_dma2 semaphore(%arg11 : memref<!tpu.dma_semaphore, #tpu.memory_space<semaphore_mem>>) src(%arg5 : memref<384x128xf32, #tpu.memory_space<any>>) dst(%arg10 : memref<384x128xf32, #tpu.memory_space<vmem>>)
    %c1_i32_41 = arith.constant 1 : i32
    %128 = tpu.dynamic_rotate %127 by %c1_i32_41 dim 0 : vector<32x128xf32>, i32 -> vector<32x128xf32>
    %c-1_i32_42 = arith.constant -1 : i32
    %129 = vector.broadcast %c-1_i32_42 : i32 to vector<32x1xi32>
    %130 = arith.addi %18, %129 : vector<32x1xi32>
    %c0_i32_43 = arith.constant 0 : i32
    %131 = vector.broadcast %c0_i32_43 : i32 to vector<32x1xi32>
    %132 = arith.cmpi sge, %130, %131 : vector<32x1xi32>
    %c-1_i32_44 = arith.constant -1 : i32
    %133 = vector.broadcast %c-1_i32_44 : i32 to vector<32x1xi32>
    %134 = arith.addi %18, %133 : vector<32x1xi32>
    %c16_i32_45 = arith.constant 16 : i32
    %135 = vector.broadcast %c16_i32_45 : i32 to vector<32x1xi32>
    %136 = arith.cmpi slt, %134, %135 : vector<32x1xi32>
    %137 = arith.andi %132, %136 : vector<32x1xi1>
    %cst_46 = arith.constant 0.000000e+00 : f32
    %138 = vector.shape_cast %137 : vector<32x1xi1> to vector<32x1xi1>
    %139 = vector.broadcast %138 : vector<32x1xi1> to vector<32x128xi1>
    %140 = vector.broadcast %cst_46 : f32 to vector<32x128xf32>
    %141 = arith.select %139, %128, %140 : vector<32x128xi1>, vector<32x128xf32>
    %c31_i32_47 = arith.constant 31 : i32
    %142 = tpu.dynamic_rotate %127 by %c31_i32_47 dim 0 : vector<32x128xf32>, i32 -> vector<32x128xf32>
    %c1_i32_48 = arith.constant 1 : i32
    %143 = vector.broadcast %c1_i32_48 : i32 to vector<32x1xi32>
    %144 = arith.addi %18, %143 : vector<32x1xi32>
    %c0_i32_49 = arith.constant 0 : i32
    %145 = vector.broadcast %c0_i32_49 : i32 to vector<32x1xi32>
    %146 = arith.cmpi sge, %144, %145 : vector<32x1xi32>
    %c1_i32_50 = arith.constant 1 : i32
    %147 = vector.broadcast %c1_i32_50 : i32 to vector<32x1xi32>
    %148 = arith.addi %18, %147 : vector<32x1xi32>
    %c16_i32_51 = arith.constant 16 : i32
    %149 = vector.broadcast %c16_i32_51 : i32 to vector<32x1xi32>
    %150 = arith.cmpi slt, %148, %149 : vector<32x1xi32>
    %151 = arith.andi %146, %150 : vector<32x1xi1>
    %cst_52 = arith.constant 0.000000e+00 : f32
    %152 = vector.shape_cast %151 : vector<32x1xi1> to vector<32x1xi1>
    %153 = vector.broadcast %152 : vector<32x1xi1> to vector<32x128xi1>
    %154 = vector.broadcast %cst_52 : f32 to vector<32x128xf32>
    %155 = arith.select %153, %142, %154 : vector<32x128xi1>, vector<32x128xf32>
    %156 = tpu.concatenate %141, %127, %155 in 1 : vector<32x128xf32>, vector<32x128xf32>, vector<32x128xf32> -> vector<32x384xf32>
    %c0_53 = arith.constant 0 : index
    %c0_54 = arith.constant 0 : index
    %157 = vector.load %arg10[%c0_53, %c0_54] : memref<384x128xf32, #tpu.memory_space<vmem>>, vector<384x128xf32>
    %cst_55 = arith.constant dense<0.000000e+00> : vector<32x128xf32>
    %158 = tpu.matmul %156, %157, %cst_55 {dimension_numbers = #tpu.dot_dimension_numbers<[1], [0], [0], [1], [0, 0, 1, 1], [], []>} : vector<32x384xf32>, vector<384x128xf32>, vector<32x128xf32> -> vector<32x128xf32>
    %cst_56 = arith.constant dense<0.000000e+00> : vector<128xf32>
    %159 = vector.multi_reduction <add>, %158, %cst_56 [0] : vector<32x128xf32> to vector<128xf32>
    %160 = vector.shape_cast %159 : vector<128xf32> to vector<1x128xf32>
    %161 = arith.mulf %158, %158 : vector<32x128xf32>
    %cst_57 = arith.constant dense<0.000000e+00> : vector<128xf32>
    %162 = vector.multi_reduction <add>, %161, %cst_57 [0] : vector<32x128xf32> to vector<128xf32>
    %163 = vector.shape_cast %162 : vector<128xf32> to vector<1x128xf32>
    %164 = tpu.concatenate %160, %163 in 0 : vector<1x128xf32>, vector<1x128xf32> -> vector<2x128xf32>
    %cst_58 = arith.constant dense<0.000000e+00> : vector<2x8xf32>
    %165 = tpu.matmul %164, %39, %cst_58 {dimension_numbers = #tpu.dot_dimension_numbers<[1], [0], [0], [1], [0, 0, 1, 1], [], []>} : vector<2x128xf32>, vector<128x8xf32>, vector<2x8xf32> -> vector<2x8xf32>
    %166 = vector.extract_strided_slice %165 {offsets = [0, 0], sizes = [1, 8], strides = [1, 1]} : vector<2x8xf32> to vector<1x8xf32>
    %cst_59 = arith.constant 0.001953125 : f32
    %167 = vector.broadcast %cst_59 : f32 to vector<1x8xf32>
    %168 = arith.mulf %166, %167 : vector<1x8xf32>
    %169 = vector.extract_strided_slice %165 {offsets = [1, 0], sizes = [1, 8], strides = [1, 1]} : vector<2x8xf32> to vector<1x8xf32>
    %cst_60 = arith.constant 0.001953125 : f32
    %170 = vector.broadcast %cst_60 : f32 to vector<1x8xf32>
    %171 = arith.mulf %169, %170 : vector<1x8xf32>
    %172 = arith.mulf %168, %168 : vector<1x8xf32>
    %173 = arith.subf %171, %172 : vector<1x8xf32>
    %c0_61 = arith.constant 0 : index
    %c0_62 = arith.constant 0 : index
    %174 = vector.load %arg6[%c0_61, %c0_62] : memref<1x8xf32, #tpu.memory_space<vmem>>, vector<1x8xf32>
    %cst_63 = arith.constant 9.99999974E-6 : f32
    %175 = vector.broadcast %cst_63 : f32 to vector<1x8xf32>
    %176 = arith.addf %173, %175 : vector<1x8xf32>
    %177 = math.rsqrt %176 : vector<1x8xf32>
    %178 = arith.mulf %174, %177 : vector<1x8xf32>
    %c0_64 = arith.constant 0 : index
    %c0_65 = arith.constant 0 : index
    %179 = vector.load %arg7[%c0_64, %c0_65] : memref<1x8xf32, #tpu.memory_space<vmem>>, vector<1x8xf32>
    %180 = arith.mulf %168, %178 : vector<1x8xf32>
    %181 = arith.subf %179, %180 : vector<1x8xf32>
    %182 = tpu.concatenate %178, %181 in 0 : vector<1x8xf32>, vector<1x8xf32> -> vector<2x8xf32>
    %cst_66 = arith.constant dense<0.000000e+00> : vector<2x128xf32>
    %183 = tpu.matmul %182, %60, %cst_66 {dimension_numbers = #tpu.dot_dimension_numbers<[1], [0], [0], [1], [0, 0, 1, 1], [], []>} : vector<2x8xf32>, vector<8x128xf32>, vector<2x128xf32> -> vector<2x128xf32>
    %184 = vector.extract_strided_slice %183 {offsets = [0, 0], sizes = [1, 128], strides = [1, 1]} : vector<2x128xf32> to vector<1x128xf32>
    %185 = vector.broadcast %184 : vector<1x128xf32> to vector<32x128xf32>
    %186 = arith.mulf %158, %185 : vector<32x128xf32>
    %187 = vector.extract_strided_slice %183 {offsets = [1, 0], sizes = [1, 128], strides = [1, 1]} : vector<2x128xf32> to vector<1x128xf32>
    %188 = vector.broadcast %187 : vector<1x128xf32> to vector<32x128xf32>
    %189 = arith.addf %186, %188 : vector<32x128xf32>
    %190 = arith.addf %1, %189 : vector<32x128xf32>
    %c0_67 = arith.constant 0 : index
    %c0_68 = arith.constant 0 : index
    %191 = vector.load %arg9[%c0_67, %c0_68] : memref<32x128xf32, #tpu.memory_space<vmem>>, vector<32x128xf32>
    tpu.vector_store %arg9[%c0_67, %c0_68], %190 {strides = array<i32>} : memref<32x128xf32, #tpu.memory_space<vmem>>, vector<32x128xf32>,
    return
  }
  func.func @transform_0(%arg0: i32) -> (i32, i32) {
    %c0_i32 = arith.constant 0 : i32
    %c0_i32_0 = arith.constant 0 : i32
    %c0_i32_1 = arith.constant 0 : i32
    return %c0_i32, %c0_i32_0 : i32, i32
  }
  func.func @transform_1(%arg0: i32) -> (i32, i32) {
    %c0_i32 = arith.constant 0 : i32
    %c0_i32_0 = arith.constant 0 : i32
    %c0_i32_1 = arith.constant 0 : i32
    return %c0_i32, %c0_i32_0 : i32, i32
  }
  func.func @transform_2(%arg0: i32) -> (i32, i32) {
    %c0_i32 = arith.constant 0 : i32
    %c0_i32_0 = arith.constant 0 : i32
    %c0_i32_1 = arith.constant 0 : i32
    return %c0_i32, %c0_i32_0 : i32, i32
  }
  func.func @transform_3(%arg0: i32) -> (i32, i32) {
    %c0_i32 = arith.constant 0 : i32
    %c0_i32_0 = arith.constant 0 : i32
    %c0_i32_1 = arith.constant 0 : i32
    return %c0_i32, %c0_i32_0 : i32, i32
  }
  func.func @transform_5(%arg0: i32) -> (i32, i32) {
    %c0_i32 = arith.constant 0 : i32
    %c0_i32_0 = arith.constant 0 : i32
    %c0_i32_1 = arith.constant 0 : i32
    return %c0_i32, %c0_i32_0 : i32, i32
  }
  func.func @transform_6(%arg0: i32) -> (i32, i32) {
    %c0_i32 = arith.constant 0 : i32
    %c0_i32_0 = arith.constant 0 : i32
    %c0_i32_1 = arith.constant 0 : i32
    return %c0_i32, %c0_i32_0 : i32, i32
  }
  func.func @transform_7(%arg0: i32) -> (i32, i32) {
    %c0_i32 = arith.constant 0 : i32
    %c0_i32_0 = arith.constant 0 : i32
    %c0_i32_1 = arith.constant 0 : i32
    return %c0_i32, %c0_i32_0 : i32, i32
  }
  func.func @transform_8(%arg0: i32) -> (i32, i32) {
    %c0_i32 = arith.constant 0 : i32
    %c0_i32_0 = arith.constant 0 : i32
    %c0_i32_1 = arith.constant 0 : i32
    return %c0_i32, %c0_i32_0 : i32, i32
  }
}

</mosaic_0001>

<llo_original>
// kernel: residual_block_pallas_nhwc.1
$region0: #{residual_block_pallas_nhwc.1}
  #allocation0 [shape = 'u32[]', space=smem, size = 0x4, offset = 0x4, fixed_abs, tag = 'smem constant byte address 0x4 - core index']
  #allocation1 [shape = 'u32[72,128]{1,0:T(1,128)}', space=vmem, size = 0x9000, scoped, tag = 'internal scratch']
  #allocation2 [shape = 'f32[384,128]{1,0:T(8,128)}', space=vmem, size = 0x30000, scoped, tag = 'scratch operand']
  #allocation3 [shape = 's32[1]{0}', space=sflag, size = 0x4, scoped, tag = 'scratch operand']
  #allocation4 [shape = 'f32[1,1]{1,0:T(1,128)S(6)}', space=smem, size = 0x200, scoped, tag = 'scoped memory for residual_block_pallas_nhwc.1']
  #allocation5 [shape = 's32[]', space=sflag, size = 0x4, offset = 0, fixed_abs, tag = 'sflag constant byte address 0x0 - dummy sync flag']
  %s0 = inlined_call_operand.vmem [shape: f32[32,128], index: 0, kind: input, shape index: {}]
  %s1 = inlined_call_operand.vmem [shape: f32[384,128], index: 1, kind: input, shape index: {}]
  %s2 = inlined_call_operand.vmem [shape: f32[1,8], index: 2, kind: input, shape index: {}]
  %s3 = inlined_call_operand.vmem [shape: f32[1,8], index: 3, kind: input, shape index: {}]
  %s4 = inlined_call_operand.vmem [shape: f32[384,128], index: 4, kind: input, shape index: {}]
  %s5 = inlined_call_operand.vmem [shape: f32[1,8], index: 5, kind: input, shape index: {}]
  %s6 = inlined_call_operand.vmem [shape: f32[1,8], index: 6, kind: input, shape index: {}]
  %s7 = inlined_call_operand.<no memory space> [shape: f32[1,1], index: 7, kind: input, shape index: {}]
  %s8 = inlined_call_operand.vmem [shape: f32[32,128], index: 8, kind: output, shape index: {}]
  %s9 = sld [smem:[#allocation0]]
  $region57: #{residual_block_pallas_nhwc.1} parent=0
    _
  %s11 = ssub.s32 1, %s9
  %s12 = scalar_select 0, %s11, %s9
  %13 = sst [smem:[#allocation4]] %s7
  // Predicated region
  $region2: #{residual_block_pallas_nhwc.1} parent=0 // pred_check
    _
  $region3: #{residual_block_pallas_nhwc.1} parent=0 // pred_check_branch
    %15 = sbr.rel (0) target = $region5
  $region4: #{residual_block_pallas_nhwc.1} parent=0 // pred_region
    _
  $region5: #{residual_block_pallas_nhwc.1} parent=0 // pred_fallthru
    _
  // Predicated region
  $region6: #{residual_block_pallas_nhwc.1} parent=0 // pred_check
    _
  $region7: #{residual_block_pallas_nhwc.1} parent=0 // pred_check_branch
    %17 = sbr.rel (0) target = $region9
  $region8: #{residual_block_pallas_nhwc.1} parent=0 // pred_region
    _
  $region9: #{residual_block_pallas_nhwc.1} parent=0 // pred_fallthru
    _
  // Predicated region
  $region10: #{residual_block_pallas_nhwc.1} parent=0 // pred_check
    _
  $region11: #{residual_block_pallas_nhwc.1} parent=0 // pred_check_branch
    %19 = sbr.rel (0) target = $region13
  $region12: #{residual_block_pallas_nhwc.1} parent=0 // pred_region
    _
  $region13: #{residual_block_pallas_nhwc.1} parent=0 // pred_fallthru
    _
  // Predicated region
  $region14: #{residual_block_pallas_nhwc.1} parent=0 // pred_check
    _
  $region15: #{residual_block_pallas_nhwc.1} parent=0 // pred_check_branch
    %21 = sbr.rel (0) target = $region17
  $region16: #{residual_block_pallas_nhwc.1} parent=0 // pred_region
    _
  $region17: #{residual_block_pallas_nhwc.1} parent=0 // pred_fallthru
    _
  // Predicated region
  $region18: #{residual_block_pallas_nhwc.1} parent=0 // pred_check
    _
  $region19: #{residual_block_pallas_nhwc.1} parent=0 // pred_check_branch
    %23 = sbr.rel (0) target = $region21
  $region20: #{residual_block_pallas_nhwc.1} parent=0 // pred_region
    _
  $region21: #{residual_block_pallas_nhwc.1} parent=0 // pred_fallthru
    _
  // Predicated region
  $region22: #{residual_block_pallas_nhwc.1} parent=0 // pred_check
    _
  $region23: #{residual_block_pallas_nhwc.1} parent=0 // pred_check_branch
    %25 = sbr.rel (0) target = $region25
  $region24: #{residual_block_pallas_nhwc.1} parent=0 // pred_region
    _
  $region25: #{residual_block_pallas_nhwc.1} parent=0 // pred_fallthru
    _
  // Predicated region
  $region26: #{residual_block_pallas_nhwc.1} parent=0 // pred_check
    _
  $region27: #{residual_block_pallas_nhwc.1} parent=0 // pred_check_branch
    %27 = sbr.rel (0) target = $region29
  $region28: #{residual_block_pallas_nhwc.1} parent=0 // pred_region
    _
  $region29: #{residual_block_pallas_nhwc.1} parent=0 // pred_fallthru
    _
  %s28 = sld [smem:[#allocation4]]
  // Predicated region
  $region30: #{residual_block_pallas_nhwc.1} parent=0 // pred_check
    _
  $region31: #{residual_block_pallas_nhwc.1} parent=0 // pred_check_branch
    %30 = sbr.rel (0) target = $region33
  $region32: #{residual_block_pallas_nhwc.1} parent=0 // pred_region
    loop: start=0, step=1, limit=1
    $region34: #{residual_block_pallas_nhwc.1} parent=32 // loop_pre_header
      _
    $region35: #{residual_block_pallas_nhwc.1} parent=32 // loop_header
      %s32 = sphi 0, %s36
      %p33 = scmp.ge.s32.totalorder %s32, 1
      %s37 = sphi %s4, %s4
      %s38 = sphi [#allocation2], [#allocation2]
    $region36: #{residual_block_pallas_nhwc.1} parent=32 // loop_header_branch
      %35 = sbr.rel (%p33) target = $region40
    $region37: #{residual_block_pallas_nhwc.1} parent=32 // loop_body
      %v39 = vld [vmem:[%s37] sm:$0xff]
      %40 = vst [vmem:[%s38] sm:$0xff] %v39
      %v41 = vld [vmem:[%s37 + $0x8] sm:$0xff]
      %42 = vst [vmem:[%s38 + $0x8] sm:$0xff] %v41
      %v43 = vld [vmem:[%s37 + $0x10] sm:$0xff]
      %44 = vst [vmem:[%s38 + $0x10] sm:$0xff] %v43
      %v45 = vld [vmem:[%s37 + $0x18] sm:$0xff]
      %46 = vst [vmem:[%s38 + $0x18] sm:$0xff] %v45
      %v47 = vld [vmem:[%s37 + $0x20] sm:$0xff]
      %48 = vst [vmem:[%s38 + $0x20] sm:$0xff] %v47
      %v49 = vld [vmem:[%s37 + $0x28] sm:$0xff]
      %50 = vst [vmem:[%s38 + $0x28] sm:$0xff] %v49
      %v51 = vld [vmem:[%s37 + $0x30] sm:$0xff]
      %52 = vst [vmem:[%s38 + $0x30] sm:$0xff] %v51
      %v53 = vld [vmem:[%s37 + $0x38] sm:$0xff]
      %54 = vst [vmem:[%s38 + $0x38] sm:$0xff] %v53
      %v55 = vld [vmem:[%s37 + $0x40] sm:$0xff]
      %56 = vst [vmem:[%s38 + $0x40] sm:$0xff] %v55
      %v57 = vld [vmem:[%s37 + $0x48] sm:$0xff]
      %58 = vst [vmem:[%s38 + $0x48] sm:$0xff] %v57
      %v59 = vld [vmem:[%s37 + $0x50] sm:$0xff]
      %60 = vst [vmem:[%s38 + $0x50] sm:$0xff] %v59
      %v61 = vld [vmem:[%s37 + $0x58] sm:$0xff]
      %62 = vst [vmem:[%s38 + $0x58] sm:$0xff] %v61
      %v63 = vld [vmem:[%s37 + $0x60] sm:$0xff]
      %64 = vst [vmem:[%s38 + $0x60] sm:$0xff] %v63
      %v65 = vld [vmem:[%s37 + $0x68] sm:$0xff]
      %66 = vst [vmem:[%s38 + $0x68] sm:$0xff] %v65
      %v67 = vld [vmem:[%s37 + $0x70] sm:$0xff]
      %68 = vst [vmem:[%s38 + $0x70] sm:$0xff] %v67
      %v69 = vld [vmem:[%s37 + $0x78] sm:$0xff]
      %70 = vst [vmem:[%s38 + $0x78] sm:$0xff] %v69
      %v71 = vld [vmem:[%s37 + $0x80] sm:$0xff]
      %72 = vst [vmem:[%s38 + $0x80] sm:$0xff] %v71
      %v73 = vld [vmem:[%s37 + $0x88] sm:$0xff]
      %74 = vst [vmem:[%s38 + $0x88] sm:$0xff] %v73
      %v75 = vld [vmem:[%s37 + $0x90] sm:$0xff]
      %76 = vst [vmem:[%s38 + $0x90] sm:$0xff] %v75
      %v77 = vld [vmem:[%s37 + $0x98] sm:$0xff]
      %78 = vst [vmem:[%s38 + $0x98] sm:$0xff] %v77
      %v79 = vld [vmem:[%s37 + $0xa0] sm:$0xff]
      %80 = vst [vmem:[%s38 + $0xa0] sm:$0xff] %v79
      %v81 = vld [vmem:[%s37 + $0xa8] sm:$0xff]
      %82 = vst [vmem:[%s38 + $0xa8] sm:$0xff] %v81
      %v83 = vld [vmem:[%s37 + $0xb0] sm:$0xff]
      %84 = vst [vmem:[%s38 + $0xb0] sm:$0xff] %v83
      %v85 = vld [vmem:[%s37 + $0xb8] sm:$0xff]
      %86 = vst [vmem:[%s38 + $0xb8] sm:$0xff] %v85
      %v87 = vld [vmem:[%s37 + $0xc0] sm:$0xff]
      %88 = vst [vmem:[%s38 + $0xc0] sm:$0xff] %v87
      %v89 = vld [vmem:[%s37 + $0xc8] sm:$0xff]
      %90 = vst [vmem:[%s38 + $0xc8] sm:$0xff] %v89
      %v91 = vld [vmem:[%s37 + $0xd0] sm:$0xff]
      %92 = vst [vmem:[%s38 + $0xd0] sm:$0xff] %v91
      %v93 = vld [vmem:[%s37 + $0xd8] sm:$0xff]
      %94 = vst [vmem:[%s38 + $0xd8] sm:$0xff] %v93
      %v95 = vld [vmem:[%s37 + $0xe0] sm:$0xff]
      %96 = vst [vmem:[%s38 + $0xe0] sm:$0xff] %v95
      %v97 = vld [vmem:[%s37 + $0xe8] sm:$0xff]
      %98 = vst [vmem:[%s38 + $0xe8] sm:$0xff] %v97
      %v99 = vld [vmem:[%s37 + $0xf0] sm:$0xff]
      %100 = vst [vmem:[%s38 + $0xf0] sm:$0xff] %v99
      %v101 = vld [vmem:[%s37 + $0xf8] sm:$0xff]
      %102 = vst [vmem:[%s38 + $0xf8] sm:$0xff] %v101
      %v103 = vld [vmem:[%s37 + $0x100] sm:$0xff]
      %104 = vst [vmem:[%s38 + $0x100] sm:$0xff] %v103
      %v105 = vld [vmem:[%s37 + $0x108] sm:$0xff]
      %106 = vst [vmem:[%s38 + $0x108] sm:$0xff] %v105
      %v107 = vld [vmem:[%s37 + $0x110] sm:$0xff]
      %108 = vst [vmem:[%s38 + $0x110] sm:$0xff] %v107
      %v109 = vld [vmem:[%s37 + $0x118] sm:$0xff]
      %110 = vst [vmem:[%s38 + $0x118] sm:$0xff] %v109
      %v111 = vld [vmem:[%s37 + $0x120] sm:$0xff]
      %112 = vst [vmem:[%s38 + $0x120] sm:$0xff] %v111
      %v113 = vld [vmem:[%s37 + $0x128] sm:$0xff]
      %114 = vst [vmem:[%s38 + $0x128] sm:$0xff] %v113
      %v115 = vld [vmem:[%s37 + $0x130] sm:$0xff]
      %116 = vst [vmem:[%s38 + $0x130] sm:$0xff] %v115
      %v117 = vld [vmem:[%s37 + $0x138] sm:$0xff]
      %118 = vst [vmem:[%s38 + $0x138] sm:$0xff] %v117
      %v119 = vld [vmem:[%s37 + $0x140] sm:$0xff]
      %120 = vst [vmem:[%s38 + $0x140] sm:$0xff] %v119
      %v121 = vld [vmem:[%s37 + $0x148] sm:$0xff]
      %122 = vst [vmem:[%s38 + $0x148] sm:$0xff] %v121
      %v123 = vld [vmem:[%s37 + $0x150] sm:$0xff]
      %124 = vst [vmem:[%s38 + $0x150] sm:$0xff] %v123
      %v125 = vld [vmem:[%s37 + $0x158] sm:$0xff]
      %126 = vst [vmem:[%s38 + $0x158] sm:$0xff] %v125
      %v127 = vld [vmem:[%s37 + $0x160] sm:$0xff]
      %128 = vst [vmem:[%s38 + $0x160] sm:$0xff] %v127
      %v129 = vld [vmem:[%s37 + $0x168] sm:$0xff]
      %130 = vst [vmem:[%s38 + $0x168] sm:$0xff] %v129
      %v131 = vld [vmem:[%s37 + $0x170] sm:$0xff]
      %132 = vst [vmem:[%s38 + $0x170] sm:$0xff] %v131
      %v133 = vld [vmem:[%s37 + $0x178] sm:$0xff]
      %134 = vst [vmem:[%s38 + $0x178] sm:$0xff] %v133
    $region38: #{residual_block_pallas_nhwc.1} parent=32 // loop_footer
      %s36 = sadd.s32 1, %s32
    $region39: #{residual_block_pallas_nhwc.1} parent=32 // loop_footer_branch
      %31 = sbr.rel target = $region35
    $region40: #{residual_block_pallas_nhwc.1} parent=32 // loop_exit
      _
  $region33: #{residual_block_pallas_nhwc.1} parent=0 // pred_fallthru
    _
  // Predicated region
  $region41: #{residual_block_pallas_nhwc.1} parent=0 // pred_check
    _
  $region42: #{residual_block_pallas_nhwc.1} parent=0 // pred_check_branch
    %136 = sbr.rel target = $region44
  $region43: #{residual_block_pallas_nhwc.1} parent=0 // pred_region
    _
  $region44: #{residual_block_pallas_nhwc.1} parent=0 // pred_fallthru
    _
  // Predicated region
  $region45: #{residual_block_pallas_nhwc.1} parent=0 // pred_check
    _
  $region46: #{residual_block_pallas_nhwc.1} parent=0 // pred_check_branch
    %139 = sbr.rel (0) target = $region48
  $region47: #{residual_block_pallas_nhwc.1} parent=0 // pred_region
    %140 = vsyncadd [#allocation3], 6144
  $region48: #{residual_block_pallas_nhwc.1} parent=0 // pred_fallthru
    _
  %v141 = vld [vmem:[%s0] sm:$0xff]
  %v142 = vld [vmem:[%s0 + $0x8] sm:$0xff]
  %v143 = vld [vmem:[%s0 + $0x10] sm:$0xff]
  %v144 = vld [vmem:[%s0 + $0x18] sm:$0xff]
  %v145 = vlaneseq
  %v146 = vshrl.u32 %v145, 7
  %v147 = vadd.s32 %v146, 8
  %v148 = vadd.s32 %v146, 16
  %v149 = vadd.s32 %v146, 24
  %vm150 = vcmp.lt.s32.totalorder %v146, 0
  %v151 = vsub.s32 0, %v146
  %v152 = vsel %vm150, %v151, %v146
  %v153 = vshrl.u32 %v152, 4
  %v154 = vand.u32 %v152, 15
  %v155 = vsub.s32 0, %v154
  %v156 = vsel %vm150, %v155, %v154
  %vm157 = vcmp.lt.s32.totalorder %v147, 0
  %v158 = vsub.s32 0, %v147
  %v159 = vsel %vm157, %v158, %v147
  %v160 = vshrl.u32 %v159, 4
  %v161 = vand.u32 %v159, 15
  %v162 = vsub.s32 0, %v161
  %v163 = vsel %vm157, %v162, %v161
  %vm164 = vcmp.lt.s32.totalorder %v148, 0
  %v165 = vsub.s32 0, %v148
  %v166 = vsel %vm164, %v165, %v148
  %v167 = vshrl.u32 %v166, 4
  %v168 = vand.u32 %v166, 15
  %v169 = vsub.s32 0, %v168
  %v170 = vsel %vm164, %v169, %v168
  %vm171 = vcmp.lt.s32.totalorder %v149, 0
  %v172 = vsub.s32 0, %v149
  %v173 = vsel %vm171, %v172, %v149
  %v174 = vshrl.u32 %v173, 4
  %v175 = vand.u32 %v173, 15
  %v176 = vsub.s32 0, %v175
  %v177 = vsel %vm171, %v176, %v175
  %vm178 = vcmp.ne.s32.totalorder %v156, 0
  %vm179 = vcmp.ne.s32.totalorder %v163, 0
  %vm180 = vcmp.ne.s32.totalorder %v170, 0
  %vm181 = vcmp.ne.s32.totalorder %v177, 0
  %vm182 = vcmp.lt.s32.totalorder %v156, 0
  %vm183 = vcmp.lt.s32.totalorder %v163, 0
  %vm184 = vcmp.lt.s32.totalorder %v170, 0
  %vm185 = vcmp.lt.s32.totalorder %v177, 0
  %vm186 = vmand %vm182, %vm178
  %vm187 = vmand %vm183, %vm179
  %vm188 = vmand %vm184, %vm180
  %vm189 = vmand %vm185, %vm181
  %v190 = vadd.s32 %v156, 16
  %v191 = vadd.s32 %v163, 16
  %v192 = vadd.s32 %v170, 16
  %v193 = vadd.s32 %v177, 16
  %v194 = vsel %vm186, %v190, %v156
  %v195 = vsel %vm187, %v191, %v163
  %v196 = vsel %vm188, %v192, %v170
  %v197 = vsel %vm189, %v193, %v177
  %v198 = vadd.s32 %v146, 32
  %v199 = vadd.s32 %v146, 40
  %v200 = vadd.s32 %v146, 48
  %v201 = vadd.s32 %v146, 56
  %v202 = vadd.s32 %v146, 64
  %v203 = vadd.s32 %v146, 72
  %v204 = vadd.s32 %v146, 80
  %v205 = vadd.s32 %v146, 88
  %v206 = vadd.s32 %v146, 96
  %v207 = vadd.s32 %v146, 104
  %v208 = vadd.s32 %v146, 112
  %v209 = vadd.s32 %v146, 120
  %v210 = vlaneseq
  %v211 = vand.u32 %v210, 127
  %vm212 = vcmp.lt.s32.totalorder %v146, 0
  %v213 = vsub.s32 0, %v146
  %v214 = vsel %vm212, %v213, %v146
  %v215 = vshrl.u32 %v214, 3
  %v216 = vand.u32 %v214, 7
  %v217 = vsub.s32 0, %v216
  %v218 = vsel %vm212, %v217, %v216
  %vm219 = vcmp.lt.s32.totalorder %v147, 0
  %v220 = vsub.s32 0, %v147
  %v221 = vsel %vm219, %v220, %v147
  %v222 = vshrl.u32 %v221, 3
  %v223 = vand.u32 %v221, 7
  %v224 = vsub.s32 0, %v223
  %v225 = vsel %vm219, %v224, %v223
  %vm226 = vcmp.lt.s32.totalorder %v148, 0
  %v227 = vsub.s32 0, %v148
  %v228 = vsel %vm226, %v227, %v148
  %v229 = vshrl.u32 %v228, 3
  %v230 = vand.u32 %v228, 7
  %v231 = vsub.s32 0, %v230
  %v232 = vsel %vm226, %v231, %v230
  %vm233 = vcmp.lt.s32.totalorder %v149, 0
  %v234 = vsub.s32 0, %v149
  %v235 = vsel %vm233, %v234, %v149
  %v236 = vshrl.u32 %v235, 3
  %v237 = vand.u32 %v235, 7
  %v238 = vsub.s32 0, %v237
  %v239 = vsel %vm233, %v238, %v237
  %vm240 = vcmp.lt.s32.totalorder %v198, 0
  %v241 = vsub.s32 0, %v198
  %v242 = vsel %vm240, %v241, %v198
  %v243 = vshrl.u32 %v242, 3
  %v244 = vand.u32 %v242, 7
  %v245 = vsub.s32 0, %v244
  %v246 = vsel %vm240, %v245, %v244
  %vm247 = vcmp.lt.s32.totalorder %v199, 0
  %v248 = vsub.s32 0, %v199
  %v249 = vsel %vm247, %v248, %v199
  %v250 = vshrl.u32 %v249, 3
  %v251 = vand.u32 %v249, 7
  %v252 = vsub.s32 0, %v251
  %v253 = vsel %vm247, %v252, %v251
  %vm254 = vcmp.lt.s32.totalorder %v200, 0
  %v255 = vsub.s32 0, %v200
  %v256 = vsel %vm254, %v255, %v200
  %v257 = vshrl.u32 %v256, 3
  %v258 = vand.u32 %v256, 7
  %v259 = vsub.s32 0, %v258
  %v260 = vsel %vm254, %v259, %v258
  %vm261 = vcmp.lt.s32.totalorder %v201, 0
  %v262 = vsub.s32 0, %v201
  %v263 = vsel %vm261, %v262, %v201
  %v264 = vshrl.u32 %v263, 3
  %v265 = vand.u32 %v263, 7
  %v266 = vsub.s32 0, %v265
  %v267 = vsel %vm261, %v266, %v265
  %vm268 = vcmp.lt.s32.totalorder %v202, 0
  %v269 = vsub.s32 0, %v202
  %v270 = vsel %vm268, %v269, %v202
  %v271 = vshrl.u32 %v270, 3
  %v272 = vand.u32 %v270, 7
  %v273 = vsub.s32 0, %v272
  %v274 = vsel %vm268, %v273, %v272
  %vm275 = vcmp.lt.s32.totalorder %v203, 0
  %v276 = vsub.s32 0, %v203
  %v277 = vsel %vm275, %v276, %v203
  %v278 = vshrl.u32 %v277, 3
  %v279 = vand.u32 %v277, 7
  %v280 = vsub.s32 0, %v279
  %v281 = vsel %vm275, %v280, %v279
  %vm282 = vcmp.lt.s32.totalorder %v204, 0
  %v283 = vsub.s32 0, %v204
  %v284 = vsel %vm282, %v283, %v204
  %v285 = vshrl.u32 %v284, 3
  %v286 = vand.u32 %v284, 7
  %v287 = vsub.s32 0, %v286
  %v288 = vsel %vm282, %v287, %v286
  %vm289 = vcmp.lt.s32.totalorder %v205, 0
  %v290 = vsub.s32 0, %v205
  %v291 = vsel %vm289, %v290, %v205
  %v292 = vshrl.u32 %v291, 3
  %v293 = vand.u32 %v291, 7
  %v294 = vsub.s32 0, %v293
  %v295 = vsel %vm289, %v294, %v293
  %vm296 = vcmp.lt.s32.totalorder %v206, 0
  %v297 = vsub.s32 0, %v206
  %v298 = vsel %vm296, %v297, %v206
  %v299 = vshrl.u32 %v298, 3
  %v300 = vand.u32 %v298, 7
  %v301 = vsub.s32 0, %v300
  %v302 = vsel %vm296, %v301, %v300
  %vm303 = vcmp.lt.s32.totalorder %v207, 0
  %v304 = vsub.s32 0, %v207
  %v305 = vsel %vm303, %v304, %v207
  %v306 = vshrl.u32 %v305, 3
  %v307 = vand.u32 %v305, 7
  %v308 = vsub.s32 0, %v307
  %v309 = vsel %vm303, %v308, %v307
  %vm310 = vcmp.lt.s32.totalorder %v208, 0
  %v311 = vsub.s32 0, %v208
  %v312 = vsel %vm310, %v311, %v208
  %v313 = vshrl.u32 %v312, 3
  %v314 = vand.u32 %v312, 7
  %v315 = vsub.s32 0, %v314
  %v316 = vsel %vm310, %v315, %v314
  %vm317 = vcmp.lt.s32.totalorder %v209, 0
  %v318 = vsub.s32 0, %v209
  %v319 = vsel %vm317, %v318, %v209
  %v320 = vshrl.u32 %v319, 3
  %v321 = vand.u32 %v319, 7
  %v322 = vsub.s32 0, %v321
  %v323 = vsel %vm317, %v322, %v321
  %vm324 = vcmp.ne.s32.totalorder %v218, 0
  %vm325 = vcmp.ne.s32.totalorder %v225, 0
  %vm326 = vcmp.ne.s32.totalorder %v232, 0
  %vm327 = vcmp.ne.s32.totalorder %v239, 0
  %vm328 = vcmp.ne.s32.totalorder %v246, 0
  %vm329 = vcmp.ne.s32.totalorder %v253, 0
  %vm330 = vcmp.ne.s32.totalorder %v260, 0
  %vm331 = vcmp.ne.s32.totalorder %v267, 0
  %vm332 = vcmp.ne.s32.totalorder %v274, 0
  %vm333 = vcmp.ne.s32.totalorder %v281, 0
  %vm334 = vcmp.ne.s32.totalorder %v288, 0
  %vm335 = vcmp.ne.s32.totalorder %v295, 0
  %vm336 = vcmp.ne.s32.totalorder %v302, 0
  %vm337 = vcmp.ne.s32.totalorder %v309, 0
  %vm338 = vcmp.ne.s32.totalorder %v316, 0
  %vm339 = vcmp.ne.s32.totalorder %v323, 0
  %vm340 = vcmp.lt.s32.totalorder %v218, 0
  %vm341 = vcmp.lt.s32.totalorder %v225, 0
  %vm342 = vcmp.lt.s32.totalorder %v232, 0
  %vm343 = vcmp.lt.s32.totalorder %v239, 0
  %vm344 = vcmp.lt.s32.totalorder %v246, 0
  %vm345 = vcmp.lt.s32.totalorder %v253, 0
  %vm346 = vcmp.lt.s32.totalorder %v260, 0
  %vm347 = vcmp.lt.s32.totalorder %v267, 0
  %vm348 = vcmp.lt.s32.totalorder %v274, 0
  %vm349 = vcmp.lt.s32.totalorder %v281, 0
  %vm350 = vcmp.lt.s32.totalorder %v288, 0
  %vm351 = vcmp.lt.s32.totalorder %v295, 0
  %vm352 = vcmp.lt.s32.totalorder %v302, 0
  %vm353 = vcmp.lt.s32.totalorder %v309, 0
  %vm354 = vcmp.lt.s32.totalorder %v316, 0
  %vm355 = vcmp.lt.s32.totalorder %v323, 0
  %vm356 = vmand %vm340, %vm324
  %vm357 = vmand %vm341, %vm325
  %vm358 = vmand %vm342, %vm326
  %vm359 = vmand %vm343, %vm327
  %vm360 = vmand %vm344, %vm328
  %vm361 = vmand %vm345, %vm329
  %vm362 = vmand %vm346, %vm330
  %vm363 = vmand %vm347, %vm331
  %vm364 = vmand %vm348, %vm332
  %vm365 = vmand %vm349, %vm333
  %vm366 = vmand %vm350, %vm334
  %vm367 = vmand %vm351, %vm335
  %vm368 = vmand %vm352, %vm336
  %vm369 = vmand %vm353, %vm337
  %vm370 = vmand %vm354, %vm338
  %vm371 = vmand %vm355, %vm339
  %v372 = vadd.s32 %v218, 8
  %v373 = vadd.s32 %v225, 8
  %v374 = vadd.s32 %v232, 8
  %v375 = vadd.s32 %v239, 8
  %v376 = vadd.s32 %v246, 8
  %v377 = vadd.s32 %v253, 8
  %v378 = vadd.s32 %v260, 8
  %v379 = vadd.s32 %v267, 8
  %v380 = vadd.s32 %v274, 8
  %v381 = vadd.s32 %v281, 8
  %v382 = vadd.s32 %v288, 8
  %v383 = vadd.s32 %v295, 8
  %v384 = vadd.s32 %v302, 8
  %v385 = vadd.s32 %v309, 8
  %v386 = vadd.s32 %v316, 8
  %v387 = vadd.s32 %v323, 8
  %v388 = vsel %vm356, %v372, %v218
  %v389 = vsel %vm357, %v373, %v225
  %v390 = vsel %vm358, %v374, %v232
  %v391 = vsel %vm359, %v375, %v239
  %v392 = vsel %vm360, %v376, %v246
  %v393 = vsel %vm361, %v377, %v253
  %v394 = vsel %vm362, %v378, %v260
  %v395 = vsel %vm363, %v379, %v267
  %v396 = vsel %vm364, %v380, %v274
  %v397 = vsel %vm365, %v381, %v281
  %v398 = vsel %vm366, %v382, %v288
  %v399 = vsel %vm367, %v383, %v295
  %v400 = vsel %vm368, %v384, %v302
  %v401 = vsel %vm369, %v385, %v309
  %v402 = vsel %vm370, %v386, %v316
  %v403 = vsel %vm371, %v387, %v323
  %vm404 = vcmp.eq.s32.totalorder %v388, %v211
  %vm405 = vcmp.eq.s32.totalorder %v389, %v211
  %vm406 = vcmp.eq.s32.totalorder %v390, %v211
  %vm407 = vcmp.eq.s32.totalorder %v391, %v211
  %vm408 = vcmp.eq.s32.totalorder %v392, %v211
  %vm409 = vcmp.eq.s32.totalorder %v393, %v211
  %vm410 = vcmp.eq.s32.totalorder %v394, %v211
  %vm411 = vcmp.eq.s32.totalorder %v395, %v211
  %vm412 = vcmp.eq.s32.totalorder %v396, %v211
  %vm413 = vcmp.eq.s32.totalorder %v397, %v211
  %vm414 = vcmp.eq.s32.totalorder %v398, %v211
  %vm415 = vcmp.eq.s32.totalorder %v399, %v211
  %vm416 = vcmp.eq.s32.totalorder %v400, %v211
  %vm417 = vcmp.eq.s32.totalorder %v401, %v211
  %vm418 = vcmp.eq.s32.totalorder %v402, %v211
  %vm419 = vcmp.eq.s32.totalorder %v403, %v211
  %v420 = vsel %vm404, 1, 0
  %v421 = vsel %vm405, 1, 0
  %v422 = vsel %vm406, 1, 0
  %v423 = vsel %vm407, 1, 0
  %v424 = vsel %vm408, 1, 0
  %v425 = vsel %vm409, 1, 0
  %v426 = vsel %vm410, 1, 0
  %v427 = vsel %vm411, 1, 0
  %v428 = vsel %vm412, 1, 0
  %v429 = vsel %vm413, 1, 0
  %v430 = vsel %vm414, 1, 0
  %v431 = vsel %vm415, 1, 0
  %v432 = vsel %vm416, 1, 0
  %v433 = vsel %vm417, 1, 0
  %v434 = vsel %vm418, 1, 0
  %v435 = vsel %vm419, 1, 0
  %v436 = vcvt.s32.f32 %v420
  %v437 = vcvt.s32.f32 %v421
  %v438 = vcvt.s32.f32 %v422
  %v439 = vcvt.s32.f32 %v423
  %v440 = vcvt.s32.f32 %v424
  %v441 = vcvt.s32.f32 %v425
  %v442 = vcvt.s32.f32 %v426
  %v443 = vcvt.s32.f32 %v427
  %v444 = vcvt.s32.f32 %v428
  %v445 = vcvt.s32.f32 %v429
  %v446 = vcvt.s32.f32 %v430
  %v447 = vcvt.s32.f32 %v431
  %v448 = vcvt.s32.f32 %v432
  %v449 = vcvt.s32.f32 %v433
  %v450 = vcvt.s32.f32 %v434
  %v451 = vcvt.s32.f32 %v435
  %vm452 = vcmp.lt.s32.totalorder %v211, 0
  %v453 = vsub.s32 0, %v211
  %v454 = vsel %vm452, %v453, %v211
  %v455 = vshrl.u32 %v454, 3
  %v456 = vand.u32 %v454, 7
  %v457 = vsub.s32 0, %v456
  %v458 = vsel %vm452, %v457, %v456
  %vm459 = vcmp.ne.s32.totalorder %v458, 0
  %vm460 = vcmp.lt.s32.totalorder %v458, 0
  %vm461 = vmand %vm460, %vm459
  %v462 = vadd.s32 %v458, 8
  %v463 = vsel %vm461, %v462, %v458
  %vm464 = vcmp.eq.s32.totalorder %v463, %v146
  %v465 = vsel %vm464, 1, 0
  %v466 = vcvt.s32.f32 %v465
  %v467 = vrot.slane %v141, 7
  %v468 = vrot.slane %v142, 7
  %v469 = vrot.slane %v143, 7
  %v470 = vrot.slane %v144, 7
  %vm471 = vcmp.lt.s32.totalorder %v146, 1
  %v472 = vsel %vm471, %v469, %v470
  %v473 = vsel %vm471, %v468, %v469
  %v474 = vsel %vm471, %v467, %v468
  %v475 = vsel %vm471, %v470, %v467
  %v476 = vadd.s32 %v194, 4294967295
  %v477 = vadd.s32 %v195, 4294967295
  %v478 = vadd.s32 %v196, 4294967295
  %v479 = vadd.s32 %v197, 4294967295
  %vm480 = vcmp.ge.s32.totalorder %v476, 0
  %vm481 = vcmp.ge.s32.totalorder %v477, 0
  %vm482 = vcmp.ge.s32.totalorder %v478, 0
  %vm483 = vcmp.ge.s32.totalorder %v479, 0
  %vm484 = vcmp.lt.s32.totalorder %v476, 16
  %vm485 = vcmp.lt.s32.totalorder %v477, 16
  %vm486 = vcmp.lt.s32.totalorder %v478, 16
  %vm487 = vcmp.lt.s32.totalorder %v479, 16
  %vm488 = vmand %vm480, %vm484
  %vm489 = vmand %vm481, %vm485
  %vm490 = vmand %vm482, %vm486
  %vm491 = vmand %vm483, %vm487
  %v492 = vsel %vm488, 1, 0
  %v493 = vsel %vm489, 1, 0
  %v494 = vsel %vm490, 1, 0
  %v495 = vsel %vm491, 1, 0
  %vm496 = vcmp.eq.s32.totalorder %v492, 1
  %vm497 = vcmp.eq.s32.totalorder %v493, 1
  %vm498 = vcmp.eq.s32.totalorder %v494, 1
  %vm499 = vcmp.eq.s32.totalorder %v495, 1
  %v500 = vsel %vm496, %v475, 0.0
  %v501 = vsel %vm497, %v474, 0.0
  %v502 = vsel %vm498, %v473, 0.0
  %v503 = vsel %vm499, %v472, 0.0
  %v504 = vrot.slane %v141, 1
  %v505 = vrot.slane %v142, 1
  %v506 = vrot.slane %v143, 1
  %v507 = vrot.slane %v144, 1
  %vm508 = vcmp.lt.s32.totalorder %v146, 7
  %v509 = vsel %vm508, %v506, %v507
  %v510 = vsel %vm508, %v505, %v506
  %v511 = vsel %vm508, %v504, %v505
  %v512 = vsel %vm508, %v507, %v504
  %v513 = vadd.s32 %v194, 1
  %v514 = vadd.s32 %v195, 1
  %v515 = vadd.s32 %v196, 1
  %v516 = vadd.s32 %v197, 1
  %vm517 = vcmp.ge.s32.totalorder %v513, 0
  %vm518 = vcmp.ge.s32.totalorder %v514, 0
  %vm519 = vcmp.ge.s32.totalorder %v515, 0
  %vm520 = vcmp.ge.s32.totalorder %v516, 0
  %vm521 = vcmp.lt.s32.totalorder %v513, 16
  %vm522 = vcmp.lt.s32.totalorder %v514, 16
  %vm523 = vcmp.lt.s32.totalorder %v515, 16
  %vm524 = vcmp.lt.s32.totalorder %v516, 16
  %vm525 = vmand %vm517, %vm521
  %vm526 = vmand %vm518, %vm522
  %vm527 = vmand %vm519, %vm523
  %vm528 = vmand %vm520, %vm524
  %v529 = vsel %vm525, 1, 0
  %v530 = vsel %vm526, 1, 0
  %v531 = vsel %vm527, 1, 0
  %v532 = vsel %vm528, 1, 0
  %vm533 = vcmp.eq.s32.totalorder %v529, 1
  %vm534 = vcmp.eq.s32.totalorder %v530, 1
  %vm535 = vcmp.eq.s32.totalorder %v531, 1
  %vm536 = vcmp.eq.s32.totalorder %v532, 1
  %v537 = vsel %vm533, %v511, 0.0
  %v538 = vsel %vm534, %v510, 0.0
  %v539 = vsel %vm535, %v509, 0.0
  %v540 = vsel %vm536, %v512, 0.0
  %v541 = vld [vmem:[%s1] sm:$0xff]
  %v542 = vld [vmem:[%s1 + $0x8] sm:$0xff]
  %v543 = vld [vmem:[%s1 + $0x10] sm:$0xff]
  %v544 = vld [vmem:[%s1 + $0x18] sm:$0xff]
  %v545 = vld [vmem:[%s1 + $0x20] sm:$0xff]
  %v546 = vld [vmem:[%s1 + $0x28] sm:$0xff]
  %v547 = vld [vmem:[%s1 + $0x30] sm:$0xff]
  %v548 = vld [vmem:[%s1 + $0x38] sm:$0xff]
  %v549 = vld [vmem:[%s1 + $0x40] sm:$0xff]
  %v550 = vld [vmem:[%s1 + $0x48] sm:$0xff]
  %v551 = vld [vmem:[%s1 + $0x50] sm:$0xff]
  %v552 = vld [vmem:[%s1 + $0x58] sm:$0xff]
  %v553 = vld [vmem:[%s1 + $0x60] sm:$0xff]
  %v554 = vld [vmem:[%s1 + $0x68] sm:$0xff]
  %v555 = vld [vmem:[%s1 + $0x70] sm:$0xff]
  %v556 = vld [vmem:[%s1 + $0x78] sm:$0xff]
  %v557 = vld [vmem:[%s1 + $0x80] sm:$0xff]
  %v558 = vld [vmem:[%s1 + $0x88] sm:$0xff]
  %v559 = vld [vmem:[%s1 + $0x90] sm:$0xff]
  %v560 = vld [vmem:[%s1 + $0x98] sm:$0xff]
  %v561 = vld [vmem:[%s1 + $0xa0] sm:$0xff]
  %v562 = vld [vmem:[%s1 + $0xa8] sm:$0xff]
  %v563 = vld [vmem:[%s1 + $0xb0] sm:$0xff]
  %v564 = vld [vmem:[%s1 + $0xb8] sm:$0xff]
  %v565 = vld [vmem:[%s1 + $0xc0] sm:$0xff]
  %v566 = vld [vmem:[%s1 + $0xc8] sm:$0xff]
  %v567 = vld [vmem:[%s1 + $0xd0] sm:$0xff]
  %v568 = vld [vmem:[%s1 + $0xd8] sm:$0xff]
  %v569 = vld [vmem:[%s1 + $0xe0] sm:$0xff]
  %v570 = vld [vmem:[%s1 + $0xe8] sm:$0xff]
  %v571 = vld [vmem:[%s1 + $0xf0] sm:$0xff]
  %v572 = vld [vmem:[%s1 + $0xf8] sm:$0xff]
  %v573 = vld [vmem:[%s1 + $0x100] sm:$0xff]
  %v574 = vld [vmem:[%s1 + $0x108] sm:$0xff]
  %v575 = vld [vmem:[%s1 + $0x110] sm:$0xff]
  %v576 = vld [vmem:[%s1 + $0x118] sm:$0xff]
  %v577 = vld [vmem:[%s1 + $0x120] sm:$0xff]
  %v578 = vld [vmem:[%s1 + $0x128] sm:$0xff]
  %v579 = vld [vmem:[%s1 + $0x130] sm:$0xff]
  %v580 = vld [vmem:[%s1 + $0x138] sm:$0xff]
  %v581 = vld [vmem:[%s1 + $0x140] sm:$0xff]
  %v582 = vld [vmem:[%s1 + $0x148] sm:$0xff]
  %v583 = vld [vmem:[%s1 + $0x150] sm:$0xff]
  %v584 = vld [vmem:[%s1 + $0x158] sm:$0xff]
  %v585 = vld [vmem:[%s1 + $0x160] sm:$0xff]
  %v586 = vld [vmem:[%s1 + $0x168] sm:$0xff]
  %v587 = vld [vmem:[%s1 + $0x170] sm:$0xff]
  %v588 = vld [vmem:[%s1 + $0x178] sm:$0xff]
  %589 = vmatpush.msra.mxu0 %v556
  %590 = vmatpush.msra.mxu0 %v555
  %591 = vmatpush.msra.mxu0 %v554
  %592 = vmatpush.msra.mxu0 %v553
  %593 = vmatpush.msra.mxu0 %v552
  %594 = vmatpush.msra.mxu0 %v551
  %595 = vmatpush.msra.mxu0 %v550
  %596 = vmatpush.msra.mxu0 %v549
  %597 = vmatpush.msra.mxu0 %v548
  %598 = vmatpush.msra.mxu0 %v547
  %599 = vmatpush.msra.mxu0 %v546
  %600 = vmatpush.msra.mxu0 %v545
  %601 = vmatpush.msra.mxu0 %v544
  %602 = vmatpush.msra.mxu0 %v543
  %603 = vmatpush.msra.mxu0 %v542
  %604 = vmatpush.msra.mxu0 %v541
  %605 = vmatmul.f32.gmra.mxu0 %v500
  %v606 = vpop.f32.mrf.mxu0
  %v607 = vadd.f32 0.0, %v606
  %608 = vmatmul.f32.gmra.mxu0 %v501
  %v609 = vpop.f32.mrf.mxu0
  %v610 = vadd.f32 0.0, %v609
  %611 = vmatmul.f32.gmra.mxu0 %v502
  %v612 = vpop.f32.mrf.mxu0
  %v613 = vadd.f32 0.0, %v612
  %614 = vmatmul.f32.gmra.mxu0 %v503
  %v615 = vpop.f32.mrf.mxu0
  %v616 = vadd.f32 0.0, %v615
  %617 = vdwg.mxu0
  %618 = vmatpush.msra.mxu0 %v572
  %619 = vmatpush.msra.mxu0 %v571
  %620 = vmatpush.msra.mxu0 %v570
  %621 = vmatpush.msra.mxu0 %v569
  %622 = vmatpush.msra.mxu0 %v568
  %623 = vmatpush.msra.mxu0 %v567
  %624 = vmatpush.msra.mxu0 %v566
  %625 = vmatpush.msra.mxu0 %v565
  %626 = vmatpush.msra.mxu0 %v564
  %627 = vmatpush.msra.mxu0 %v563
  %628 = vmatpush.msra.mxu0 %v562
  %629 = vmatpush.msra.mxu0 %v561
  %630 = vmatpush.msra.mxu0 %v560
  %631 = vmatpush.msra.mxu0 %v559
  %632 = vmatpush.msra.mxu0 %v558
  %633 = vmatpush.msra.mxu0 %v557
  %634 = vmatmul.f32.gmra.mxu0 %v141
  %v635 = vpop.f32.mrf.mxu0
  %v636 = vadd.f32 %v607, %v635
  %637 = vmatmul.f32.gmra.mxu0 %v142
  %v638 = vpop.f32.mrf.mxu0
  %v639 = vadd.f32 %v610, %v638
  %640 = vmatmul.f32.gmra.mxu0 %v143
  %v641 = vpop.f32.mrf.mxu0
  %v642 = vadd.f32 %v613, %v641
  %643 = vmatmul.f32.gmra.mxu0 %v144
  %v644 = vpop.f32.mrf.mxu0
  %v645 = vadd.f32 %v616, %v644
  %646 = vdwg.mxu0
  %647 = vmatpush.msra.mxu0 %v588
  %648 = vmatpush.msra.mxu0 %v587
  %649 = vmatpush.msra.mxu0 %v586
  %650 = vmatpush.msra.mxu0 %v585
  %651 = vmatpush.msra.mxu0 %v584
  %652 = vmatpush.msra.mxu0 %v583
  %653 = vmatpush.msra.mxu0 %v582
  %654 = vmatpush.msra.mxu0 %v581
  %655 = vmatpush.msra.mxu0 %v580
  %656 = vmatpush.msra.mxu0 %v579
  %657 = vmatpush.msra.mxu0 %v578
  %658 = vmatpush.msra.mxu0 %v577
  %659 = vmatpush.msra.mxu0 %v576
  %660 = vmatpush.msra.mxu0 %v575
  %661 = vmatpush.msra.mxu0 %v574
  %662 = vmatpush.msra.mxu0 %v573
  %663 = vmatmul.f32.gmra.mxu0 %v537
  %v664 = vpop.f32.mrf.mxu0
  %v665 = vadd.f32 %v636, %v664
  %666 = vmatmul.f32.gmra.mxu0 %v538
  %v667 = vpop.f32.mrf.mxu0
  %v668 = vadd.f32 %v639, %v667
  %669 = vmatmul.f32.gmra.mxu0 %v539
  %v670 = vpop.f32.mrf.mxu0
  %v671 = vadd.f32 %v642, %v670
  %672 = vmatmul.f32.gmra.mxu0 %v540
  %v673 = vpop.f32.mrf.mxu0
  %v674 = vadd.f32 %v645, %v673
  %675 = vdwg.mxu0
  %v676 = vadd.f32 %v665, %v668
  %v677 = vadd.f32 %v676, %v671
  %v678 = vadd.f32 %v677, %v674
  %v679 = vrot.slane %v678, 4
  %v680 = vadd.f32 %v678, %v679
  %v681 = vrot.slane %v680, 2
  %v682 = vadd.f32 %v680, %v681
  %v683 = vrot.slane %v682, 1
  %v684 = vadd.f32 %v682, %v683
  %v685 = vmul.f32 %v665, %v665
  %v686 = vmul.f32 %v668, %v668
  %v687 = vmul.f32 %v671, %v671
  %v688 = vmul.f32 %v674, %v674
  %v689 = vadd.f32 %v685, %v686
  %v690 = vadd.f32 %v689, %v687
  %v691 = vadd.f32 %v690, %v688
  %v692 = vrot.slane %v691, 4
  %v693 = vadd.f32 %v691, %v692
  %v694 = vrot.slane %v693, 2
  %v695 = vadd.f32 %v693, %v694
  %v696 = vrot.slane %v695, 1
  %v697 = vadd.f32 %v695, %v696
  %vm698 = vcmask 1040384
  %v699 = vsel %vm698, %v684, %v697
  %700 = vmatpush.msra.mxu0 %v451
  %701 = vmatpush.msra.mxu0 %v450
  %702 = vmatpush.msra.mxu0 %v449
  %703 = vmatpush.msra.mxu0 %v448
  %704 = vmatpush.msra.mxu0 %v447
  %705 = vmatpush.msra.mxu0 %v446
  %706 = vmatpush.msra.mxu0 %v445
  %707 = vmatpush.msra.mxu0 %v444
  %708 = vmatpush.msra.mxu0 %v443
  %709 = vmatpush.msra.mxu0 %v442
  %710 = vmatpush.msra.mxu0 %v441
  %711 = vmatpush.msra.mxu0 %v440
  %712 = vmatpush.msra.mxu0 %v439
  %713 = vmatpush.msra.mxu0 %v438
  %714 = vmatpush.msra.mxu0 %v437
  %715 = vmatpush.msra.mxu0 %v436
  %716 = vmatmul.f32.gmra.mxu0 %v699
  %v717 = vpop.f32.mrf.mxu0
  %v718 = vadd.f32 0.0, %v717
  %719 = vdwg.mxu0
  %v720 = vmul.f32 %v718, 0.001953125
  %v721 = vmul.f32 %v720, %v720
  %v723 = vrot.slane %v721, 7
  %v725 = vsub.f32 %v720, %v723
  %v726 = vld [vmem:[%s2] sm:$0x1]
  %v727 = vadd.f32 %v725, 1e-05
  %v728 = vrsqrt.pop %v727
  %v729 = vmul.f32 %v728, %v727
  %v730 = vmul.f32 %v729, %v728
  %v731 = vmul.f32 0.5, %v730
  %v732 = vsub.f32 1.5, %v731
  %v733 = vmul.f32 %v728, %v732
  %vm734 = vweird.f32 %v727
  %vm735 = vweird.f32 %v728
  %vm736 = vmor %vm734, %vm735
  %v737 = vsel %vm736, %v728, %v733
  %739 = vst [vmem:[#allocation1] sm:$0xff] %v737
  %s740 = scalar_lea.vmem [#allocation1], 1
  %v741 = vld [vmem:[%s740] ss:$9 sm:$0xff]
  %v743 = vmul.f32 %v726, %v741
  %v744 = vld [vmem:[%s3] sm:$0x1]
  %v745 = vmul.f32 %v720, %v743
  %v746 = vsub.f32 %v744, %v745
  %v748 = vperm.slane %v746, 0
  %v750 = vsel %vm698, %v743, %v748
  %vm751 = vcmask 64512
  %v753 = vsel %vm751, %v750, 0
  %755 = vmatpush.msra.mxu0 0.0
  %756 = vmatpush.msra.mxu0 0.0
  %757 = vmatpush.msra.mxu0 0.0
  %758 = vmatpush.msra.mxu0 0.0
  %759 = vmatpush.msra.mxu0 0.0
  %760 = vmatpush.msra.mxu0 0.0
  %761 = vmatpush.msra.mxu0 0.0
  %762 = vmatpush.msra.mxu0 0.0
  %763 = vmatpush.msra.mxu0 0.0
  %764 = vmatpush.msra.mxu0 0.0
  %765 = vmatpush.msra.mxu0 0.0
  %766 = vmatpush.msra.mxu0 0.0
  %767 = vmatpush.msra.mxu0 0.0
  %768 = vmatpush.msra.mxu0 0.0
  %769 = vmatpush.msra.mxu0 0.0
  %770 = vmatpush.msra.mxu0 %v466
  %771 = vmatmul.f32.gmra.mxu0 %v753
  %v772 = vpop.f32.mrf.mxu0
  %v773 = vadd.f32 0.0, %v772
  %774 = vdwg.mxu0
  %v775 = vperm.slane %v773, 0
  %v776 = vmul.f32 %v665, %v775
  %v777 = vmul.f32 %v668, %v775
  %v778 = vmul.f32 %v671, %v775
  %v779 = vmul.f32 %v674, %v775
  %v780 = vperm.slane %v773, 1
  %v781 = vadd.f32 %v776, %v780
  %v782 = vadd.f32 %v777, %v780
  %v783 = vadd.f32 %v778, %v780
  %v784 = vadd.f32 %v779, %v780
  %vm785 = vcmp.gt.f32.partialorder %v781, 0.0
  %vm786 = vcmp.gt.f32.partialorder %v782, 0.0
  %vm787 = vcmp.gt.f32.partialorder %v783, 0.0
  %vm788 = vcmp.gt.f32.partialorder %v784, 0.0
  %v789 = vstv %s28
  %v790 = vmul.f32 %v789, %v781
  %v791 = vmul.f32 %v789, %v782
  %v792 = vmul.f32 %v789, %v783
  %v793 = vmul.f32 %v789, %v784
  %v794 = vsel %vm785, %v781, %v790
  %v795 = vsel %vm786, %v782, %v791
  %v796 = vsel %vm787, %v783, %v792
  %v797 = vsel %vm788, %v784, %v793
  %s798 = smul.u32 384, 1
  %s799 = sshll.u32 %s798, 4
  %800 = dma.done [#allocation3], %s799
  %v801 = vrot.slane %v794, 7
  %v802 = vrot.slane %v795, 7
  %v803 = vrot.slane %v796, 7
  %v804 = vrot.slane %v797, 7
  %v805 = vsel %vm471, %v803, %v804
  %v806 = vsel %vm471, %v802, %v803
  %v807 = vsel %vm471, %v801, %v802
  %v808 = vsel %vm471, %v804, %v801
  %v809 = vsel %vm496, %v808, 0.0
  %v810 = vsel %vm497, %v807, 0.0
  %v811 = vsel %vm498, %v806, 0.0
  %v812 = vsel %vm499, %v805, 0.0
  %v813 = vrot.slane %v794, 1
  %v814 = vrot.slane %v795, 1
  %v815 = vrot.slane %v796, 1
  %v816 = vrot.slane %v797, 1
  %v817 = vsel %vm508, %v815, %v816
  %v818 = vsel %vm508, %v814, %v815
  %v819 = vsel %vm508, %v813, %v814
  %v820 = vsel %vm508, %v816, %v813
  %v821 = vsel %vm533, %v819, 0.0
  %v822 = vsel %vm534, %v818, 0.0
  %v823 = vsel %vm535, %v817, 0.0
  %v824 = vsel %vm536, %v820, 0.0
  %v825 = vld [vmem:[#allocation2] sm:$0xff]
  %v826 = vld [vmem:[#allocation2 + $0x8] sm:$0xff]
  %v827 = vld [vmem:[#allocation2 + $0x10] sm:$0xff]
  %v828 = vld [vmem:[#allocation2 + $0x18] sm:$0xff]
  %v829 = vld [vmem:[#allocation2 + $0x20] sm:$0xff]
  %v830 = vld [vmem:[#allocation2 + $0x28] sm:$0xff]
  %v831 = vld [vmem:[#allocation2 + $0x30] sm:$0xff]
  %v832 = vld [vmem:[#allocation2 + $0x38] sm:$0xff]
  %v833 = vld [vmem:[#allocation2 + $0x40] sm:$0xff]
  %v834 = vld [vmem:[#allocation2 + $0x48] sm:$0xff]
  %v835 = vld [vmem:[#allocation2 + $0x50] sm:$0xff]
  %v836 = vld [vmem:[#allocation2 + $0x58] sm:$0xff]
  %v837 = vld [vmem:[#allocation2 + $0x60] sm:$0xff]
  %v838 = vld [vmem:[#allocation2 + $0x68] sm:$0xff]
  %v839 = vld [vmem:[#allocation2 + $0x70] sm:$0xff]
  %v840 = vld [vmem:[#allocation2 + $0x78] sm:$0xff]
  %v841 = vld [vmem:[#allocation2 + $0x80] sm:$0xff]
  %v842 = vld [vmem:[#allocation2 + $0x88] sm:$0xff]
  %v843 = vld [vmem:[#allocation2 + $0x90] sm:$0xff]
  %v844 = vld [vmem:[#allocation2 + $0x98] sm:$0xff]
  %v845 = vld [vmem:[#allocation2 + $0xa0] sm:$0xff]
  %v846 = vld [vmem:[#allocation2 + $0xa8] sm:$0xff]
  %v847 = vld [vmem:[#allocation2 + $0xb0] sm:$0xff]
  %v848 = vld [vmem:[#allocation2 + $0xb8] sm:$0xff]
  %v849 = vld [vmem:[#allocation2 + $0xc0] sm:$0xff]
  %v850 = vld [vmem:[#allocation2 + $0xc8] sm:$0xff]
  %v851 = vld [vmem:[#allocation2 + $0xd0] sm:$0xff]
  %v852 = vld [vmem:[#allocation2 + $0xd8] sm:$0xff]
  %v853 = vld [vmem:[#allocation2 + $0xe0] sm:$0xff]
  %v854 = vld [vmem:[#allocation2 + $0xe8] sm:$0xff]
  %v855 = vld [vmem:[#allocation2 + $0xf0] sm:$0xff]
  %v856 = vld [vmem:[#allocation2 + $0xf8] sm:$0xff]
  %v857 = vld [vmem:[#allocation2 + $0x100] sm:$0xff]
  %v858 = vld [vmem:[#allocation2 + $0x108] sm:$0xff]
  %v859 = vld [vmem:[#allocation2 + $0x110] sm:$0xff]
  %v860 = vld [vmem:[#allocation2 + $0x118] sm:$0xff]
  %v861 = vld [vmem:[#allocation2 + $0x120] sm:$0xff]
  %v862 = vld [vmem:[#allocation2 + $0x128] sm:$0xff]
  %v863 = vld [vmem:[#allocation2 + $0x130] sm:$0xff]
  %v864 = vld [vmem:[#allocation2 + $0x138] sm:$0xff]
  %v865 = vld [vmem:[#allocation2 + $0x140] sm:$0xff]
  %v866 = vld [vmem:[#allocation2 + $0x148] sm:$0xff]
  %v867 = vld [vmem:[#allocation2 + $0x150] sm:$0xff]
  %v868 = vld [vmem:[#allocation2 + $0x158] sm:$0xff]
  %v869 = vld [vmem:[#allocation2 + $0x160] sm:$0xff]
  %v870 = vld [vmem:[#allocation2 + $0x168] sm:$0xff]
  %v871 = vld [vmem:[#allocation2 + $0x170] sm:$0xff]
  %v872 = vld [vmem:[#allocation2 + $0x178] sm:$0xff]
  %873 = vmatpush.msra.mxu0 %v840
  %874 = vmatpush.msra.mxu0 %v839
  %875 = vmatpush.msra.mxu0 %v838
  %876 = vmatpush.msra.mxu0 %v837
  %877 = vmatpush.msra.mxu0 %v836
  %878 = vmatpush.msra.mxu0 %v835
  %879 = vmatpush.msra.mxu0 %v834
  %880 = vmatpush.msra.mxu0 %v833
  %881 = vmatpush.msra.mxu0 %v832
  %882 = vmatpush.msra.mxu0 %v831
  %883 = vmatpush.msra.mxu0 %v830
  %884 = vmatpush.msra.mxu0 %v829
  %885 = vmatpush.msra.mxu0 %v828
  %886 = vmatpush.msra.mxu0 %v827
  %887 = vmatpush.msra.mxu0 %v826
  %888 = vmatpush.msra.mxu0 %v825
  %889 = vmatmul.f32.gmra.mxu0 %v809
  %v890 = vpop.f32.mrf.mxu0
  %v891 = vadd.f32 0.0, %v890
  %892 = vmatmul.f32.gmra.mxu0 %v810
  %v893 = vpop.f32.mrf.mxu0
  %v894 = vadd.f32 0.0, %v893
  %895 = vmatmul.f32.gmra.mxu0 %v811
  %v896 = vpop.f32.mrf.mxu0
  %v897 = vadd.f32 0.0, %v896
  %898 = vmatmul.f32.gmra.mxu0 %v812
  %v899 = vpop.f32.mrf.mxu0
  %v900 = vadd.f32 0.0, %v899
  %901 = vdwg.mxu0
  %902 = vmatpush.msra.mxu0 %v856
  %903 = vmatpush.msra.mxu0 %v855
  %904 = vmatpush.msra.mxu0 %v854
  %905 = vmatpush.msra.mxu0 %v853
  %906 = vmatpush.msra.mxu0 %v852
  %907 = vmatpush.msra.mxu0 %v851
  %908 = vmatpush.msra.mxu0 %v850
  %909 = vmatpush.msra.mxu0 %v849
  %910 = vmatpush.msra.mxu0 %v848
  %911 = vmatpush.msra.mxu0 %v847
  %912 = vmatpush.msra.mxu0 %v846
  %913 = vmatpush.msra.mxu0 %v845
  %914 = vmatpush.msra.mxu0 %v844
  %915 = vmatpush.msra.mxu0 %v843
  %916 = vmatpush.msra.mxu0 %v842
  %917 = vmatpush.msra.mxu0 %v841
  %918 = vmatmul.f32.gmra.mxu0 %v794
  %v919 = vpop.f32.mrf.mxu0
  %v920 = vadd.f32 %v891, %v919
  %921 = vmatmul.f32.gmra.mxu0 %v795
  %v922 = vpop.f32.mrf.mxu0
  %v923 = vadd.f32 %v894, %v922
  %924 = vmatmul.f32.gmra.mxu0 %v796
  %v925 = vpop.f32.mrf.mxu0
  %v926 = vadd.f32 %v897, %v925
  %927 = vmatmul.f32.gmra.mxu0 %v797
  %v928 = vpop.f32.mrf.mxu0
  %v929 = vadd.f32 %v900, %v928
  %930 = vdwg.mxu0
  %931 = vmatpush.msra.mxu0 %v872
  %932 = vmatpush.msra.mxu0 %v871
  %933 = vmatpush.msra.mxu0 %v870
  %934 = vmatpush.msra.mxu0 %v869
  %935 = vmatpush.msra.mxu0 %v868
  %936 = vmatpush.msra.mxu0 %v867
  %937 = vmatpush.msra.mxu0 %v866
  %938 = vmatpush.msra.mxu0 %v865
  %939 = vmatpush.msra.mxu0 %v864
  %940 = vmatpush.msra.mxu0 %v863
  %941 = vmatpush.msra.mxu0 %v862
  %942 = vmatpush.msra.mxu0 %v861
  %943 = vmatpush.msra.mxu0 %v860
  %944 = vmatpush.msra.mxu0 %v859
  %945 = vmatpush.msra.mxu0 %v858
  %946 = vmatpush.msra.mxu0 %v857
  %947 = vmatmul.f32.gmra.mxu0 %v821
  %v948 = vpop.f32.mrf.mxu0
  %v949 = vadd.f32 %v920, %v948
  %950 = vmatmul.f32.gmra.mxu0 %v822
  %v951 = vpop.f32.mrf.mxu0
  %v952 = vadd.f32 %v923, %v951
  %953 = vmatmul.f32.gmra.mxu0 %v823
  %v954 = vpop.f32.mrf.mxu0
  %v955 = vadd.f32 %v926, %v954
  %956 = vmatmul.f32.gmra.mxu0 %v824
  %v957 = vpop.f32.mrf.mxu0
  %v958 = vadd.f32 %v929, %v957
  %959 = vdwg.mxu0
  %v960 = vadd.f32 %v949, %v952
  %v961 = vadd.f32 %v960, %v955
  %v962 = vadd.f32 %v961, %v958
  %v963 = vrot.slane %v962, 4
  %v964 = vadd.f32 %v962, %v963
  %v965 = vrot.slane %v964, 2
  %v966 = vadd.f32 %v964, %v965
  %v967 = vrot.slane %v966, 1
  %v968 = vadd.f32 %v966, %v967
  %v969 = vmul.f32 %v949, %v949
  %v970 = vmul.f32 %v952, %v952
  %v971 = vmul.f32 %v955, %v955
  %v972 = vmul.f32 %v958, %v958
  %v973 = vadd.f32 %v969, %v970
  %v974 = vadd.f32 %v973, %v971
  %v975 = vadd.f32 %v974, %v972
  %v976 = vrot.slane %v975, 4
  %v977 = vadd.f32 %v975, %v976
  %v978 = vrot.slane %v977, 2
  %v979 = vadd.f32 %v977, %v978
  %v980 = vrot.slane %v979, 1
  %v981 = vadd.f32 %v979, %v980
  %v982 = vsel %vm698, %v968, %v981
  %983 = vmatpush.msra.mxu0 %v451
  %984 = vmatpush.msra.mxu0 %v450
  %985 = vmatpush.msra.mxu0 %v449
  %986 = vmatpush.msra.mxu0 %v448
  %987 = vmatpush.msra.mxu0 %v447
  %988 = vmatpush.msra.mxu0 %v446
  %989 = vmatpush.msra.mxu0 %v445
  %990 = vmatpush.msra.mxu0 %v444
  %991 = vmatpush.msra.mxu0 %v443
  %992 = vmatpush.msra.mxu0 %v442
  %993 = vmatpush.msra.mxu0 %v441
  %994 = vmatpush.msra.mxu0 %v440
  %995 = vmatpush.msra.mxu0 %v439
  %996 = vmatpush.msra.mxu0 %v438
  %997 = vmatpush.msra.mxu0 %v437
  %998 = vmatpush.msra.mxu0 %v436
  %999 = vmatmul.f32.gmra.mxu0 %v982
  %v1000 = vpop.f32.mrf.mxu0
  %v1001 = vadd.f32 0.0, %v1000
  %1002 = vdwg.mxu0
  %v1003 = vmul.f32 %v1001, 0.001953125
  %v1004 = vmul.f32 %v1003, %v1003
  %v1006 = vrot.slane %v1004, 7
  %v1008 = vsub.f32 %v1003, %v1006
  %v1009 = vld [vmem:[%s5] sm:$0x1]
  %v1010 = vadd.f32 %v1008, 1e-05
  %v1011 = vrsqrt.pop %v1010
  %v1012 = vmul.f32 %v1011, %v1010
  %v1013 = vmul.f32 %v1012, %v1011
  %v1014 = vmul.f32 0.5, %v1013
  %v1015 = vsub.f32 1.5, %v1014
  %v1016 = vmul.f32 %v1011, %v1015
  %vm1017 = vweird.f32 %v1010
  %vm1018 = vweird.f32 %v1011
  %vm1019 = vmor %vm1017, %vm1018
  %v1020 = vsel %vm1019, %v1011, %v1016
  %1022 = vst [vmem:[#allocation1] sm:$0xff] %v1020
  %s1023 = scalar_lea.vmem [#allocation1], 1
  %v1024 = vld [vmem:[%s1023] ss:$9 sm:$0xff]
  %v1026 = vmul.f32 %v1009, %v1024
  %v1027 = vld [vmem:[%s6] sm:$0x1]
  %v1028 = vmul.f32 %v1003, %v1026
  %v1029 = vsub.f32 %v1027, %v1028
  %v1031 = vperm.slane %v1029, 0
  %v1033 = vsel %vm698, %v1026, %v1031
  %v1035 = vsel %vm751, %v1033, 0
  %1037 = vmatpush.msra.mxu0 0.0
  %1038 = vmatpush.msra.mxu0 0.0
  %1039 = vmatpush.msra.mxu0 0.0
  %1040 = vmatpush.msra.mxu0 0.0
  %1041 = vmatpush.msra.mxu0 0.0
  %1042 = vmatpush.msra.mxu0 0.0
  %1043 = vmatpush.msra.mxu0 0.0
  %1044 = vmatpush.msra.mxu0 0.0
  %1045 = vmatpush.msra.mxu0 0.0
  %1046 = vmatpush.msra.mxu0 0.0
  %1047 = vmatpush.msra.mxu0 0.0
  %1048 = vmatpush.msra.mxu0 0.0
  %1049 = vmatpush.msra.mxu0 0.0
  %1050 = vmatpush.msra.mxu0 0.0
  %1051 = vmatpush.msra.mxu0 0.0
  %1052 = vmatpush.msra.mxu0 %v466
  %1053 = vmatmul.f32.gmra.mxu0 %v1035
  %v1054 = vpop.f32.mrf.mxu0
  %v1055 = vadd.f32 0.0, %v1054
  %1056 = vdwg.mxu0
  %v1057 = vperm.slane %v1055, 0
  %v1058 = vmul.f32 %v949, %v1057
  %v1059 = vmul.f32 %v952, %v1057
  %v1060 = vmul.f32 %v955, %v1057
  %v1061 = vmul.f32 %v958, %v1057
  %v1062 = vperm.slane %v1055, 1
  %v1063 = vadd.f32 %v1058, %v1062
  %v1064 = vadd.f32 %v1059, %v1062
  %v1065 = vadd.f32 %v1060, %v1062
  %v1066 = vadd.f32 %v1061, %v1062
  %v1067 = vadd.f32 %v141, %v1063
  %v1068 = vadd.f32 %v142, %v1064
  %v1069 = vadd.f32 %v143, %v1065
  %v1070 = vadd.f32 %v144, %v1066
  %1071 = vst [vmem:[%s8] sm:$0xff] %v1067
  %1072 = vst [vmem:[%s8 + $0x8] sm:$0xff] %v1068
  %1073 = vst [vmem:[%s8 + $0x10] sm:$0xff] %v1069
  %1074 = vst [vmem:[%s8 + $0x18] sm:$0xff] %v1070
  // Predicated region
  $region49: #{residual_block_pallas_nhwc.1} parent=0 // pred_check
    _
  $region50: #{residual_block_pallas_nhwc.1} parent=0 // pred_check_branch
    %1076 = sbr.rel (0) target = $region52
  $region51: #{residual_block_pallas_nhwc.1} parent=0 // pred_region
    _
  $region52: #{residual_block_pallas_nhwc.1} parent=0 // pred_fallthru
    _
  // Predicated region
  $region53: #{residual_block_pallas_nhwc.1} parent=0 // pred_check
    _
  $region54: #{residual_block_pallas_nhwc.1} parent=0 // pred_check_branch
    %1078 = sbr.rel (0) target = $region56
  $region55: #{residual_block_pallas_nhwc.1} parent=0 // pred_region
    _
  $region56: #{residual_block_pallas_nhwc.1} parent=0 // pred_fallthru
    _
  %1079 = vsyncmov [#allocation3]
  %s1080 = vpop.sfrf %1079
  %p1081 = scmp.eq.s32.totalorder %s1080, 0
  %p1082 = pneg %p1081
  %1084 = shalt.err (%p1082)

</llo_original>
